<compile_context>
chip_gen: v5e
topology: v5e:2x2
jax: 0.10.0
libtpu: 0.0.40
codegen_flags: <defaults>
</compile_context>

<pallas_src>
import functools

import jax
import jax.numpy as jnp
from jax.experimental import pallas as pl
from jax.experimental.pallas import tpu as pltpu


def _round_up(x, m):
    return (x + m - 1) // m * m


# Scoped-VMEM budget: at TN=1024 the footprint is ~12 MiB (pair/rel/pred/gt
# double-buffered tiles + resident W1a/W1b/W2 + f32 hidden intermediate).
# 32 MiB is comfortably above that and valid on every generation.
_VMEM_LIMIT_BYTES = 32 * 1024 * 1024

_TILE_CHOICES = (1024, 512, 256, 128)
_STEP_OVERHEAD_ROWS = 64  # one grid step costs roughly as much MXU time as ~64 rows


def _choose_row_tiling(n):
    """Pick (row tile TN, padded N).

    Goals: TN multiple of 16 (bf16 sublane packing), >=2 tiles so v7x megacore
    sharding has work, large TN to amortize per-step overhead, low padded-row
    waste (MXU-bound v5e).
    """
    n16 = _round_up(max(n, 1), 16)
    if n16 <= 256:
        # Small problems: two roughly equal half tiles (second v7x core busy).
        tn = max(16, _round_up((n16 + 1) // 2, 16))
        return tn, 2 * tn
    best = None
    for tn in _TILE_CHOICES:
        n_pad = _round_up(n16, tn)
        tiles = n_pad // tn
        waste = n_pad - n16
        key = (0 if tiles >= 2 else 1,            # prefer >=2 tiles (v7x)
               tiles * _STEP_OVERHEAD_ROWS + waste,  # overhead + padded-row waste
               -tn)                               # tie-break: larger tile
        if best is None or key < best[0]:
            best = (key, tn, n_pad)
    return best[1], best[2]


# ----------------------------------------------------------------------------
# Kernel bodies
# ----------------------------------------------------------------------------
def _mlp_tile(pair_ref, rel_ref, w1a_ref, w1b_ref, b1_ref, w2_ref, b2_ref):
    """2-layer interest MLP for one row tile: bf16 MXU operands, f32 accumulation."""
    h = jnp.dot(pair_ref[...], w1a_ref[...], preferred_element_type=jnp.float32)
    h = h + jnp.dot(rel_ref[...], w1b_ref[...], preferred_element_type=jnp.float32)
    h = jnp.maximum(h + b1_ref[...], 0.0)                       # bias + ReLU (f32)
    logits = jnp.dot(h.astype(jnp.bfloat16), w2_ref[...],
                     preferred_element_type=jnp.float32) + b2_ref[...]
    # sigmoid via tanh -> rides the EUP slot, overlaps with MXU work.
    return 0.5 * (jnp.tanh(0.5 * logits) + 1.0)


def _mlp_focal_train_kernel(pair_ref, rel_ref, gt_ref, w1a_ref, w1b_ref, b1_ref,
                            w2_ref, b2_ref, pred_ref, psum_ref, *,
                            n_valid, r_valid, tn):
    i = pl.program_id(0)

    pred = _mlp_tile(pair_ref, rel_ref, w1a_ref, w1b_ref, b1_ref, w2_ref, b2_ref)
    pred_q = pred.astype(jnp.bfloat16)
    pred_ref[...] = pred_q                                      # lane-dense bf16 store

    # ---- fused binary-focal-loss partial sums (real r_valid columns only) ----
    eps = 1e-05
    p = jnp.clip(pred_q[:, :r_valid].astype(jnp.float32), eps, 1.0 - eps)
    gt = gt_ref[...].astype(jnp.float32)                        # bf16 0/1 -> f32 exact

    rows = jax.lax.broadcasted_iota(jnp.int32, p.shape, 0) + i * tn
    valid = rows < n_valid                                      # mask padded rows

    ce_1 = gt * (-jnp.log(p))
    ce_0 = (1.0 - gt) * (-jnp.log(1.0 - p))
    fl_1 = jnp.where(valid, (1.0 - p) * ce_1, 0.0)              # pos_gamma = 1.0
    fl_0 = jnp.where(valid, p * p * ce_0, 0.0)                  # neg_gamma = 2.0
    gt_m = jnp.where(valid, gt, 0.0)

    fl_1_sum = jnp.sum(fl_1)
    fl_0_sum = jnp.sum(fl_0)
    num_pos = jnp.sum(gt_m)

    # Pack the three scalars into one (8,128) vreg (sublanes 0/1/2); summed over
    # the tile axis in JAX afterwards so the grid axis stays fully parallel.
    row_id = jax.lax.broadcasted_iota(jnp.int32, (8, 128), 0)
    packed = jnp.where(row_id == 0, fl_1_sum,
             jnp.where(row_id == 1, fl_0_sum,
             jnp.where(row_id == 2, num_pos, 0.0)))
    psum_ref[0] = packed


def _mlp_eval_kernel(pair_ref, rel_ref, w1a_ref, w1b_ref, b1_ref, w2_ref, b2_ref,
                     pred_ref):
    pred = _mlp_tile(pair_ref, rel_ref, w1a_ref, w1b_ref, b1_ref, w2_ref, b2_ref)
    pred_ref[...] = pred.astype(jnp.bfloat16)


# ----------------------------------------------------------------------------
# pallas_call wrappers
# ----------------------------------------------------------------------------
def _weight_specs(r_pad):
    # Constant index_maps -> the weights stay VMEM-resident across the grid.
    return [
        pl.BlockSpec((512, 512), lambda i: (0, 0)),             # W1[:512]
        pl.BlockSpec((512, 512), lambda i: (0, 0)),             # W1[512:]
        pl.BlockSpec((1, 512), lambda i: (0, 0)),               # b1
        pl.BlockSpec((512, r_pad), lambda i: (0, 0)),           # W2 (lane-dense pad)
        pl.BlockSpec((1, r_pad), lambda i: (0, 0)),             # b2 (lane-dense pad)
    ]


@functools.partial(jax.jit, static_argnames=("tn", "n_valid", "r_valid"))
def _run_train(pair_pad, rel_pad, gt_pad, w1a, w1b, b1, w2, b2, *,
               tn, n_valid, r_valid):
    n_pad = pair_pad.shape[0]
    r_pad = w2.shape[1]
    num_tiles = n_pad // tn

    kernel = functools.partial(_mlp_focal_train_kernel,
                               n_valid=n_valid, r_valid=r_valid, tn=tn)

    flops = 2 * n_pad * 1024 * 512 + 2 * n_pad * 512 * r_pad
    transcendentals = n_pad * (r_pad + 2 * r_valid)
    bytes_accessed = (pair_pad.size * 2 + rel_pad.size * 2 + gt_pad.size * 2
                      + (w1a.size + w1b.size + w2.size) * 2
                      + (b1.size + b2.size) * 4
                      + n_pad * r_pad * 2
                      + num_tiles * 8 * 128 * 4)

    pred_pad, partials = pl.pallas_call(
        kernel,
        out_shape=(jax.ShapeDtypeStruct((n_pad, r_pad), jnp.bfloat16),
                   jax.ShapeDtypeStruct((num_tiles, 8, 128), jnp.float32)),
        grid=(num_tiles,),
        in_specs=[
            pl.BlockSpec((tn, 512), lambda i: (i, 0)),          # pair half (bf16)
            pl.BlockSpec((tn, 512), lambda i: (i, 0)),          # rel half (bf16)
            pl.BlockSpec((tn, r_valid), lambda i: (i, 0)),      # gt, real 16 cols (bf16)
        ] + _weight_specs(r_pad),
        out_specs=(
            pl.BlockSpec((tn, r_pad), lambda i: (i, 0)),        # pred tile (bf16)
            pl.BlockSpec((1, 8, 128), lambda i: (i, 0, 0)),     # per-tile partial sums
        ),
        compiler_params=pltpu.CompilerParams(
            dimension_semantics=("parallel",),
            vmem_limit_bytes=_VMEM_LIMIT_BYTES),
        cost_estimate=pl.CostEstimate(
            flops=flops, transcendentals=transcendentals,
            bytes_accessed=bytes_accessed),
    )(pair_pad, rel_pad, gt_pad, w1a, w1b, b1, w2, b2)

    sums = jnp.sum(partials, axis=0)                            # (8, 128)
    return pred_pad, sums[0, 0], sums[1, 0], sums[2, 0]


@functools.partial(jax.jit, static_argnames=("tn",))
def _run_eval(pair_pad, rel_pad, w1a, w1b, b1, w2, b2, *, tn):
    n_pad = pair_pad.shape[0]
    r_pad = w2.shape[1]
    num_tiles = n_pad // tn

    flops = 2 * n_pad * 1024 * 512 + 2 * n_pad * 512 * r_pad
    bytes_accessed = (pair_pad.size * 2 + rel_pad.size * 2
                      + (w1a.size + w1b.size + w2.size) * 2
                      + (b1.size + b2.size) * 4
                      + n_pad * r_pad * 2)

    return pl.pallas_call(
        _mlp_eval_kernel,
        out_shape=jax.ShapeDtypeStruct((n_pad, r_pad), jnp.bfloat16),
        grid=(num_tiles,),
        in_specs=[
            pl.BlockSpec((tn, 512), lambda i: (i, 0)),
            pl.BlockSpec((tn, 512), lambda i: (i, 0)),
        ] + _weight_specs(r_pad),
        out_specs=pl.BlockSpec((tn, r_pad), lambda i: (i, 0)),
        compiler_params=pltpu.CompilerParams(
            dimension_semantics=("parallel",),
            vmem_limit_bytes=_VMEM_LIMIT_BYTES),
        cost_estimate=pl.CostEstimate(
            flops=flops, transcendentals=n_pad * r_pad,
            bytes_accessed=bytes_accessed),
    )(pair_pad, rel_pad, w1a, w1b, b1, w2, b2)


# ----------------------------------------------------------------------------
# Traceable per-image recall metrics (same ">= k-th score" semantics as the
# original torch code, which also binarizes with a >= threshold after topk).
# ----------------------------------------------------------------------------
def _per_image_metrics(pred_flat, gt_flat):
    length = pred_flat.shape[0]
    g = jnp.sum(gt_flat)
    k_dyn = jnp.round(g).astype(jnp.int32)
    has_pos = k_dyn > 0
    sorted_desc = jnp.sort(pred_flat)[::-1]

    def counts(idx):
        thr = sorted_desc[idx]
        pred_bin = (pred_flat >= thr).astype(jnp.float32)
        return jnp.sum(pred_bin * gt_flat), jnp.sum(pred_bin)

    tp20, p20 = counts(min(20, length) - 1)
    tp50, p50 = counts(min(50, length) - 1)
    tp100, p100 = counts(min(100, length) - 1)
    tp, p = counts(jnp.clip(k_dyn, 1, length) - 1)

    def gate(v):
        return jnp.where(has_pos, v, jnp.float32(0.0))

    return {'tp': gate(tp), 'p': gate(p),
            'tp20': gate(tp20), 'p20': gate(p20),
            'tp50': gate(tp50), 'p50': gate(p50),
            'tp100': gate(tp100), 'p100': gate(p100),
            'g': g}


# ----------------------------------------------------------------------------
# Module
# ----------------------------------------------------------------------------
class TripletHead4Pallas:
    """JAX/Pallas port of TripletHead4 (forward pass only)."""

    def __init__(self, relation_num=17, instance_num=80, start_threshold=0, seed=0):
        self.relation_num = relation_num
        self.instance_num = instance_num
        self.start_threshold = start_threshold
        r = relation_num - 1
        self.r = r
        self.r_pad = _round_up(max(r, 1), 128)

        key = jax.random.PRNGKey(seed)
        k1, k2, k3, k4 = jax.random.split(key, 4)
        lim1 = 1.0 / jnp.sqrt(1024.0)
        lim2 = 1.0 / jnp.sqrt(512.0)
        # stored as [in, out] (transposed relative to torch nn.Linear.weight)
        self.w1 = jax.random.uniform(k1, (1024, 512), jnp.float32, -lim1, lim1)
        self.b1 = jax.random.uniform(k2, (1, 512), jnp.float32, -lim1, lim1)
        self.w2 = jax.random.uniform(k3, (512, r), jnp.float32, -lim2, lim2)
        self.b2 = jax.random.uniform(k4, (1, r), jnp.float32, -lim2, lim2)

        # MXU-friendly parameters, built once.
        self.w1a_bf16 = self.w1[:512].astype(jnp.bfloat16)       # acts on pair half
        self.w1b_bf16 = self.w1[512:].astype(jnp.bfloat16)       # acts on rel half
        w2_pad = jnp.zeros((512, self.r_pad), jnp.float32).at[:, :r].set(self.w2)
        b2_pad = jnp.zeros((1, self.r_pad), jnp.float32).at[:, :r].set(self.b2)
        self.w2_pad_bf16 = w2_pad.astype(jnp.bfloat16)
        self.b2_pad = b2_pad

    def forward(self, pair_interest_features, relation_predicate_features,
                pair_gt_predicate_full=None, training=True, iteration=1):
        losses = {}
        metrics = {}
        if training and iteration < self.start_threshold:
            return None, None, losses, metrics

        pair_instance_nums = [int(f.shape[0]) for f in pair_interest_features]
        pair_mix = jnp.concatenate(pair_interest_features, axis=0)          # [N, 512]
        rel_mix = jnp.concatenate(relation_predicate_features, axis=0)      # [N, 512]
        n = pair_mix.shape[0]
        r = self.r

        tn, n_pad = _choose_row_tiling(n)

        # Row-pad + bf16 cast of the two halves (no 1024-wide concat in HBM).
        pair_pad = jnp.pad(pair_mix, ((0, n_pad - n), (0, 0))).astype(jnp.bfloat16)
        rel_pad = jnp.pad(rel_mix, ((0, n_pad - n), (0, 0))).astype(jnp.bfloat16)

        # TODO(synk): the original module's debug print() calls are omitted.
        if training:
            triplet_interest_gts = [g[:, 1:] for g in pair_gt_predicate_full]
            gt_mix = jnp.concatenate(triplet_interest_gts, axis=0).astype(jnp.float32)
            gt_pad = jnp.pad(gt_mix, ((0, n_pad - n), (0, 0))).astype(jnp.bfloat16)
            pred_pad, fl1_sum, fl0_sum, num_pos = _run_train(
                pair_pad, rel_pad, gt_pad,
                self.w1a_bf16, self.w1b_bf16, self.b1,
                self.w2_pad_bf16, self.b2_pad,
                tn=tn, n_valid=n, r_valid=r)
        else:
            triplet_interest_gts = None
            pred_pad = _run_eval(
                pair_pad, rel_pad,
                self.w1a_bf16, self.w1b_bf16, self.b1,
                self.w2_pad_bf16, self.b2_pad, tn=tn)

        pred_mix = pred_pad[:n, :r].astype(jnp.float32)

        # split back per image
        triplet_interest_preds = []
        start = 0
        for cnt in pair_instance_nums:
            triplet_interest_preds.append(pred_mix[start:start + cnt])
            start += cnt

        if training:
            total = float(n * r)
            num_1 = num_pos
            num_0 = jnp.float32(total) - num_1
            losses['triplet_pos_loss'] = jnp.where(
                num_1 == 0, fl1_sum, fl1_sum / jnp.where(num_1 == 0, 1.0, num_1))
            losses['triplet_neg_loss'] = jnp.where(
                num_0 == 0, fl0_sum, fl0_sum / jnp.where(num_0 == 0, 1.0, num_0))

            # recall-style metrics: traceable JAX, no per-image host sync.
            keys = ['tp', 'tp20', 'tp50', 'tp100', 'p', 'p20', 'p50', 'p100', 'g']
            acc = {k: jnp.float32(0.0) for k in keys}
            for i in range(len(pair_instance_nums)):
                m = _per_image_metrics(
                    triplet_interest_preds[i].reshape(-1),
                    triplet_interest_gts[i].reshape(-1).astype(jnp.float32))
                for k in keys:
                    acc[k] = acc[k] + m[k]
            for k in keys:
                metrics['triplet_' + k] = acc[k]

        return triplet_interest_preds, None, losses, metrics


# ----------------------------------------------------------------------------
# Pure-JAX references for correctness checks
# ----------------------------------------------------------------------------
def _mlp_reference(pair, rel, w1, b1, w2, b2):
    # Mirrors the kernel's precision recipe: bf16 MXU operands, f32 accumulation,
    # split W1, tanh-form sigmoid (kernel additionally rounds the output to bf16).
    h = (jnp.dot(pair.astype(jnp.bfloat16), w1[:512].astype(jnp.bfloat16),
                 preferred_element_type=jnp.float32)
         + jnp.dot(rel.astype(jnp.bfloat16), w1[512:].astype(jnp.bfloat16),
                   preferred_element_type=jnp.float32))
    h = jnp.maximum(h + b1, 0.0)
    logits = jnp.dot(h.astype(jnp.bfloat16), w2.astype(jnp.bfloat16),
                     preferred_element_type=jnp.float32) + b2
    return 0.5 * (jnp.tanh(0.5 * logits) + 1.0)


def _focal_reference(pred, gt):
    eps = 1e-05
    p = jnp.clip(pred, eps, 1.0 - eps)
    ce_1 = gt * (-jnp.log(p))
    ce_0 = (1.0 - gt) * (-jnp.log(1.0 - p))
    fl_1 = (1.0 - p) * ce_1
    fl_0 = p * p * ce_0
    num_1 = jnp.sum(gt)
    num_0 = pred.size - num_1
    fl_1_avg = jnp.where(num_1 == 0, jnp.sum(fl_1),
                         jnp.sum(fl_1) / jnp.where(num_1 == 0, 1.0, num_1))
    fl_0_avg = jnp.where(num_0 == 0, jnp.sum(fl_0),
                         jnp.sum(fl_0) / jnp.where(num_0 == 0, 1.0, num_0))
    return fl_1_avg, fl_0_avg


if __name__ == "__main__":
    key = jax.random.PRNGKey(0)
    relation_num = 17          # -> fc2 output dim R = 16
    pair_counts = [6, 10]      # two images, 16 pairs total

    head = TripletHead4Pallas(relation_num=relation_num, seed=0)

    keys = jax.random.split(key, 3 * len(pair_counts))
    pair_interest_features = []
    relation_predicate_features = []
    pair_gt_predicate_full = []
    for idx, cnt in enumerate(pair_counts):
        k_pi, k_rp, k_gt = keys[3 * idx], keys[3 * idx + 1], keys[3 * idx + 2]
        pair_interest_features.append(
            jax.random.normal(k_pi, (cnt, 512), jnp.float32))
        relation_predicate_features.append(
            jax.random.normal(k_rp, (cnt, 512), jnp.float32))
        gt = (jax.random.uniform(k_gt, (cnt, relation_num)) < 0.15).astype(jnp.float32)
        pair_gt_predicate_full.append(gt)

    # ---- training forward (fused MLP + focal partial sums) ------------------
    preds, _, losses, metrics = head.forward(
        pair_interest_features,
        relation_predicate_features,
        pair_gt_predicate_full,
        training=True,
        iteration=10,
    )
    preds = [jax.block_until_ready(p) for p in preds]
    losses = {k: jax.block_until_ready(v) for k, v in losses.items()}
    metrics = {k: jax.block_until_ready(jnp.asarray(v)) for k, v in metrics.items()}

    # ---- verify the Pallas MLP against a matching-precision reference -------
    pair_mix = jnp.concatenate(pair_interest_features, axis=0)
    rel_mix = jnp.concatenate(relation_predicate_features, axis=0)
    ref_pred = _mlp_reference(pair_mix, rel_mix, head.w1, head.b1, head.w2, head.b2)
    got_pred = jnp.concatenate(preds, axis=0)
    assert jnp.allclose(got_pred, ref_pred, atol=5e-3, rtol=5e-3), "Pallas MLP mismatch"

    # ---- verify the fused focal-loss reductions against pure JAX ------------
    gt_mix = jnp.concatenate([g[:, 1:] for g in pair_gt_predicate_full], axis=0)
    ref_pos, ref_neg = _focal_reference(got_pred, gt_mix)
    assert jnp.allclose(losses['triplet_pos_loss'], ref_pos, atol=1e-4, rtol=1e-3), \
        "focal pos loss mismatch"
    assert jnp.allclose(losses['triplet_neg_loss'], ref_neg, atol=1e-4, rtol=1e-3), \
        "focal neg loss mismatch"

    # ---- eval forward (MLP-only kernel variant) ------------------------------
    preds_eval, _, _, _ = head.forward(
        pair_interest_features, relation_predicate_features,
        None, training=False, iteration=10)
    got_eval = jnp.concatenate([jax.block_until_ready(p) for p in preds_eval], axis=0)
    assert jnp.allclose(got_eval, got_pred, atol=2e-3), "eval/train pred mismatch"

    print("KERNEL_OK")
</pallas_src>

<mosaic_0001>
module attributes {stable_mosaic.version = 11 : i64} {
  func.func @_mlp_focal_train_kernel(%arg0: i32, %arg1: memref<16x512xbf16, #tpu.memory_space<vmem>>, %arg2: memref<16x512xbf16, #tpu.memory_space<vmem>>, %arg3: memref<16x16xbf16, #tpu.memory_space<vmem>>, %arg4: memref<512x512xbf16, #tpu.memory_space<vmem>>, %arg5: memref<512x512xbf16, #tpu.memory_space<vmem>>, %arg6: memref<1x512xf32, #tpu.memory_space<vmem>>, %arg7: memref<512x128xbf16, #tpu.memory_space<vmem>>, %arg8: memref<1x128xf32, #tpu.memory_space<vmem>>, %arg9: memref<16x128xbf16, #tpu.memory_space<vmem>>, %arg10: memref<1x8x128xf32, #tpu.memory_space<vmem>>) attributes {dimension_semantics = [#tpu.dimension_semantics<parallel>], iteration_bounds = array<i64: 2>, scalar_prefetch = 0 : i64, scratch_operands = 0 : i64, tpu.core_type = #tpu.core_type<tc>, window_params = [{transform_indices = @transform_0, window_bounds = array<i64: 16, 512>}, {transform_indices = @transform_1, window_bounds = array<i64: 16, 512>}, {transform_indices = @transform_2, window_bounds = array<i64: 16, 16>}, {pipeline_mode = #tpu.pipeline_mode<synchronous>, transform_indices = @transform_3, window_bounds = array<i64: 512, 512>}, {pipeline_mode = #tpu.pipeline_mode<synchronous>, transform_indices = @transform_4, window_bounds = array<i64: 512, 512>}, {pipeline_mode = #tpu.pipeline_mode<synchronous>, transform_indices = @transform_5, window_bounds = array<i64: 1, 512>}, {pipeline_mode = #tpu.pipeline_mode<synchronous>, transform_indices = @transform_6, window_bounds = array<i64: 512, 128>}, {pipeline_mode = #tpu.pipeline_mode<synchronous>, transform_indices = @transform_7, window_bounds = array<i64: 1, 128>}, {transform_indices = @transform_8, window_bounds = array<i64: 16, 128>}, {transform_indices = @transform_9, window_bounds = array<i64: 1, 8, 128>}]} {
    %c0 = arith.constant 0 : index
    %c0_0 = arith.constant 0 : index
    %0 = vector.load %arg1[%c0, %c0_0] : memref<16x512xbf16, #tpu.memory_space<vmem>>, vector<16x512xbf16>
    %c0_1 = arith.constant 0 : index
    %c0_2 = arith.constant 0 : index
    %1 = vector.load %arg4[%c0_1, %c0_2] : memref<512x512xbf16, #tpu.memory_space<vmem>>, vector<512x512xbf16>
    %cst = arith.constant dense<0.000000e+00> : vector<16x512xf32>
    %2 = tpu.matmul %0, %1, %cst {dimension_numbers = #tpu.dot_dimension_numbers<[1], [0], [0], [1], [0, 0, 1, 1], [], []>} : vector<16x512xbf16>, vector<512x512xbf16>, vector<16x512xf32> -> vector<16x512xf32>
    %c0_3 = arith.constant 0 : index
    %c0_4 = arith.constant 0 : index
    %3 = vector.load %arg2[%c0_3, %c0_4] : memref<16x512xbf16, #tpu.memory_space<vmem>>, vector<16x512xbf16>
    %c0_5 = arith.constant 0 : index
    %c0_6 = arith.constant 0 : index
    %4 = vector.load %arg5[%c0_5, %c0_6] : memref<512x512xbf16, #tpu.memory_space<vmem>>, vector<512x512xbf16>
    %cst_7 = arith.constant dense<0.000000e+00> : vector<16x512xf32>
    %5 = tpu.matmul %3, %4, %cst_7 {dimension_numbers = #tpu.dot_dimension_numbers<[1], [0], [0], [1], [0, 0, 1, 1], [], []>} : vector<16x512xbf16>, vector<512x512xbf16>, vector<16x512xf32> -> vector<16x512xf32>
    %6 = arith.addf %2, %5 : vector<16x512xf32>
    %c0_8 = arith.constant 0 : index
    %c0_9 = arith.constant 0 : index
    %7 = vector.load %arg6[%c0_8, %c0_9] : memref<1x512xf32, #tpu.memory_space<vmem>>, vector<1x512xf32>
    %8 = vector.broadcast %7 : vector<1x512xf32> to vector<16x512xf32>
    %9 = arith.addf %6, %8 : vector<16x512xf32>
    %cst_10 = arith.constant 0.000000e+00 : f32
    %10 = vector.broadcast %cst_10 : f32 to vector<16x512xf32>
    %11 = arith.maximumf %9, %10 : vector<16x512xf32>
    %12 = arith.truncf %11 : vector<16x512xf32> to vector<16x512xbf16>
    %c0_11 = arith.constant 0 : index
    %c0_12 = arith.constant 0 : index
    %13 = vector.load %arg7[%c0_11, %c0_12] : memref<512x128xbf16, #tpu.memory_space<vmem>>, vector<512x128xbf16>
    %cst_13 = arith.constant dense<0.000000e+00> : vector<16x128xf32>
    %14 = tpu.matmul %12, %13, %cst_13 {dimension_numbers = #tpu.dot_dimension_numbers<[1], [0], [0], [1], [0, 0, 1, 1], [], []>} : vector<16x512xbf16>, vector<512x128xbf16>, vector<16x128xf32> -> vector<16x128xf32>
    %c0_14 = arith.constant 0 : index
    %c0_15 = arith.constant 0 : index
    %15 = vector.load %arg8[%c0_14, %c0_15] : memref<1x128xf32, #tpu.memory_space<vmem>>, vector<1x128xf32>
    %16 = vector.broadcast %15 : vector<1x128xf32> to vector<16x128xf32>
    %17 = arith.addf %14, %16 : vector<16x128xf32>
    %cst_16 = arith.constant 5.000000e-01 : f32
    %18 = vector.broadcast %cst_16 : f32 to vector<16x128xf32>
    %19 = arith.mulf %18, %17 : vector<16x128xf32>
    %20 = math.tanh %19 : vector<16x128xf32>
    %cst_17 = arith.constant 1.000000e+00 : f32
    %21 = vector.broadcast %cst_17 : f32 to vector<16x128xf32>
    %22 = arith.addf %20, %21 : vector<16x128xf32>
    %cst_18 = arith.constant 5.000000e-01 : f32
    %23 = vector.broadcast %cst_18 : f32 to vector<16x128xf32>
    %24 = arith.mulf %23, %22 : vector<16x128xf32>
    %25 = arith.truncf %24 : vector<16x128xf32> to vector<16x128xbf16>
    %c0_19 = arith.constant 0 : index
    %c0_20 = arith.constant 0 : index
    %26 = vector.load %arg9[%c0_19, %c0_20] : memref<16x128xbf16, #tpu.memory_space<vmem>>, vector<16x128xbf16>
    tpu.vector_store %arg9[%c0_19, %c0_20], %25 {strides = array<i32>} : memref<16x128xbf16, #tpu.memory_space<vmem>>, vector<16x128xbf16>,
    %27 = vector.extract_strided_slice %25 {offsets = [0, 0], sizes = [16, 16], strides = [1, 1]} : vector<16x128xbf16> to vector<16x16xbf16>
    %28 = arith.extf %27 : vector<16x16xbf16> to vector<16x16xf32>
    %cst_21 = arith.constant 9.99999974E-6 : f32
    %cst_22 = arith.constant 0.999989986 : f32
    %29 = vector.broadcast %cst_21 : f32 to vector<16x16xf32>
    %30 = arith.maximumf %29, %28 : vector<16x16xf32>
    %31 = vector.broadcast %cst_22 : f32 to vector<16x16xf32>
    %32 = arith.minimumf %31, %30 : vector<16x16xf32>
    %c0_23 = arith.constant 0 : index
    %c0_24 = arith.constant 0 : index
    %33 = vector.load %arg3[%c0_23, %c0_24] : memref<16x16xbf16, #tpu.memory_space<vmem>>, vector<16x16xbf16>
    %34 = arith.extf %33 : vector<16x16xbf16> to vector<16x16xf32>
    %35 = tpu.iota {dimensions = array<i32: 0>} : vector<16x16xi32>
    %c16_i32 = arith.constant 16 : i32
    %36 = arith.muli %arg0, %c16_i32 : i32
    %37 = vector.broadcast %36 : i32 to vector<16x16xi32>
    %38 = arith.addi %35, %37 : vector<16x16xi32>
    %c16_i32_25 = arith.constant 16 : i32
    %39 = vector.broadcast %c16_i32_25 : i32 to vector<16x16xi32>
    %40 = arith.cmpi slt, %38, %39 : vector<16x16xi32>
    %41 = math.log %32 : vector<16x16xf32>
    %cst_26 = arith.constant 0.000000e+00 : f32
    %42 = vector.broadcast %cst_26 : f32 to vector<16x16xf32>
    %43 = arith.subf %42, %41 : vector<16x16xf32>
    %44 = arith.mulf %34, %43 : vector<16x16xf32>
    %cst_27 = arith.constant 1.000000e+00 : f32
    %45 = vector.broadcast %cst_27 : f32 to vector<16x16xf32>
    %46 = arith.subf %45, %34 : vector<16x16xf32>
    %cst_28 = arith.constant 1.000000e+00 : f32
    %47 = vector.broadcast %cst_28 : f32 to vector<16x16xf32>
    %48 = arith.subf %47, %32 : vector<16x16xf32>
    %49 = math.log %48 : vector<16x16xf32>
    %cst_29 = arith.constant 0.000000e+00 : f32
    %50 = vector.broadcast %cst_29 : f32 to vector<16x16xf32>
    %51 = arith.subf %50, %49 : vector<16x16xf32>
    %52 = arith.mulf %46, %51 : vector<16x16xf32>
    %cst_30 = arith.constant 1.000000e+00 : f32
    %53 = vector.broadcast %cst_30 : f32 to vector<16x16xf32>
    %54 = arith.subf %53, %32 : vector<16x16xf32>
    %55 = arith.mulf %54, %44 : vector<16x16xf32>
    %cst_31 = arith.constant 0.000000e+00 : f32
    %56 = vector.broadcast %cst_31 : f32 to vector<16x16xf32>
    %57 = arith.select %40, %55, %56 : vector<16x16xi1>, vector<16x16xf32>
    %58 = arith.mulf %32, %32 : vector<16x16xf32>
    %59 = arith.mulf %58, %52 : vector<16x16xf32>
    %cst_32 = arith.constant 0.000000e+00 : f32
    %60 = vector.broadcast %cst_32 : f32 to vector<16x16xf32>
    %61 = arith.select %40, %59, %60 : vector<16x16xi1>, vector<16x16xf32>
    %cst_33 = arith.constant 0.000000e+00 : f32
    %62 = vector.broadcast %cst_33 : f32 to vector<16x16xf32>
    %63 = arith.select %40, %34, %62 : vector<16x16xi1>, vector<16x16xf32>
    %64 = vector.shape_cast %57 : vector<16x16xf32> to vector<1x16x16xf32>
    %cst_34 = arith.constant dense<0.000000e+00> : vector<1xf32>
    %65 = vector.multi_reduction <add>, %64, %cst_34 [1, 2] : vector<1x16x16xf32> to vector<1xf32>
    %66 = vector.shape_cast %65 : vector<1xf32> to vector<1x1x1xf32>
    %67 = vector.extract %66[0, 0, 0] : f32 from vector<1x1x1xf32>
    %68 = vector.shape_cast %61 : vector<16x16xf32> to vector<1x16x16xf32>
    %cst_35 = arith.constant dense<0.000000e+00> : vector<1xf32>
    %69 = vector.multi_reduction <add>, %68, %cst_35 [1, 2] : vector<1x16x16xf32> to vector<1xf32>
    %70 = vector.shape_cast %69 : vector<1xf32> to vector<1x1x1xf32>
    %71 = vector.extract %70[0, 0, 0] : f32 from vector<1x1x1xf32>
    %72 = vector.shape_cast %63 : vector<16x16xf32> to vector<1x16x16xf32>
    %cst_36 = arith.constant dense<0.000000e+00> : vector<1xf32>
    %73 = vector.multi_reduction <add>, %72, %cst_36 [1, 2] : vector<1x16x16xf32> to vector<1xf32>
    %74 = vector.shape_cast %73 : vector<1xf32> to vector<1x1x1xf32>
    %75 = vector.extract %74[0, 0, 0] : f32 from vector<1x1x1xf32>
    %76 = tpu.iota {dimensions = array<i32: 0>} : vector<8x128xi32>
    %c0_i32 = arith.constant 0 : i32
    %77 = vector.broadcast %c0_i32 : i32 to vector<8x128xi32>
    %78 = arith.cmpi eq, %76, %77 : vector<8x128xi32>
    %c1_i32 = arith.constant 1 : i32
    %79 = vector.broadcast %c1_i32 : i32 to vector<8x128xi32>
    %80 = arith.cmpi eq, %76, %79 : vector<8x128xi32>
    %c2_i32 = arith.constant 2 : i32
    %81 = vector.broadcast %c2_i32 : i32 to vector<8x128xi32>
    %82 = arith.cmpi eq, %76, %81 : vector<8x128xi32>
    %cst_37 = arith.constant 0.000000e+00 : f32
    %83 = vector.broadcast %75 : f32 to vector<8x128xf32>
    %84 = vector.broadcast %cst_37 : f32 to vector<8x128xf32>
    %85 = arith.select %82, %83, %84 : vector<8x128xi1>, vector<8x128xf32>
    %86 = vector.broadcast %71 : f32 to vector<8x128xf32>
    %87 = arith.select %80, %86, %85 : vector<8x128xi1>, vector<8x128xf32>
    %88 = vector.broadcast %67 : f32 to vector<8x128xf32>
    %89 = arith.select %78, %88, %87 : vector<8x128xi1>, vector<8x128xf32>
    %c0_38 = arith.constant 0 : index
    %c0_39 = arith.constant 0 : index
    %c0_40 = arith.constant 0 : index
    %90 = vector.load %arg10[%c0_38, %c0_39, %c0_40] : memref<1x8x128xf32, #tpu.memory_space<vmem>>, vector<1x8x128xf32>
    %91 = vector.shape_cast %90 : vector<1x8x128xf32> to vector<8x128xf32>
    %92 = vector.shape_cast %89 : vector<8x128xf32> to vector<1x8x128xf32>
    tpu.vector_store %arg10[%c0_38, %c0_39, %c0_40], %92 {strides = array<i32>} : memref<1x8x128xf32, #tpu.memory_space<vmem>>, vector<1x8x128xf32>,
    return
  }
  func.func @transform_0(%arg0: i32) -> (i32, i32) {
    %c0_i32 = arith.constant 0 : i32
    %c0_i32_0 = arith.constant 0 : i32
    return %arg0, %c0_i32 : i32, i32
  }
  func.func @transform_1(%arg0: i32) -> (i32, i32) {
    %c0_i32 = arith.constant 0 : i32
    %c0_i32_0 = arith.constant 0 : i32
    return %arg0, %c0_i32 : i32, i32
  }
  func.func @transform_2(%arg0: i32) -> (i32, i32) {
    %c0_i32 = arith.constant 0 : i32
    %c0_i32_0 = arith.constant 0 : i32
    return %arg0, %c0_i32 : i32, i32
  }
  func.func @transform_3(%arg0: i32) -> (i32, i32) {
    %c0_i32 = arith.constant 0 : i32
    %c0_i32_0 = arith.constant 0 : i32
    %c0_i32_1 = arith.constant 0 : i32
    return %c0_i32, %c0_i32_0 : i32, i32
  }
  func.func @transform_4(%arg0: i32) -> (i32, i32) {
    %c0_i32 = arith.constant 0 : i32
    %c0_i32_0 = arith.constant 0 : i32
    %c0_i32_1 = arith.constant 0 : i32
    return %c0_i32, %c0_i32_0 : i32, i32
  }
  func.func @transform_5(%arg0: i32) -> (i32, i32) {
    %c0_i32 = arith.constant 0 : i32
    %c0_i32_0 = arith.constant 0 : i32
    %c0_i32_1 = arith.constant 0 : i32
    return %c0_i32, %c0_i32_0 : i32, i32
  }
  func.func @transform_6(%arg0: i32) -> (i32, i32) {
    %c0_i32 = arith.constant 0 : i32
    %c0_i32_0 = arith.constant 0 : i32
    %c0_i32_1 = arith.constant 0 : i32
    return %c0_i32, %c0_i32_0 : i32, i32
  }
  func.func @transform_7(%arg0: i32) -> (i32, i32) {
    %c0_i32 = arith.constant 0 : i32
    %c0_i32_0 = arith.constant 0 : i32
    %c0_i32_1 = arith.constant 0 : i32
    return %c0_i32, %c0_i32_0 : i32, i32
  }
  func.func @transform_8(%arg0: i32) -> (i32, i32) {
    %c0_i32 = arith.constant 0 : i32
    %c0_i32_0 = arith.constant 0 : i32
    return %arg0, %c0_i32 : i32, i32
  }
  func.func @transform_9(%arg0: i32) -> (i32, i32, i32) {
    %c0_i32 = arith.constant 0 : i32
    %c0_i32_0 = arith.constant 0 : i32
    %c0_i32_1 = arith.constant 0 : i32
    return %arg0, %c0_i32, %c0_i32_0 : i32, i32, i32
  }
}

</mosaic_0001>

<llo_original>
// kernel: _run_train.1
$region0: #{_run_train.1}
  #allocation0 [shape = 'u32[]', space=smem, size = 0x4, offset = 0x4, fixed_abs, tag = 'smem constant byte address 0x4 - core index']
  #allocation1 [shape = 'u32[72,128]{1,0:T(1,128)}', space=vmem, size = 0x9000, scoped, tag = 'internal scratch']
  %s0 = inlined_call_operand.hbm [shape: bf16[32,512], index: 0, kind: input, shape index: {}]
  %s1 = inlined_call_operand.hbm [shape: bf16[32,512], index: 1, kind: input, shape index: {}]
  %s2 = inlined_call_operand.vmem [shape: bf16[32,16], index: 2, kind: input, shape index: {}]
  %s3 = inlined_call_operand.hbm [shape: bf16[512,512], index: 3, kind: input, shape index: {}]
  %s4 = inlined_call_operand.hbm [shape: bf16[512,512], index: 4, kind: input, shape index: {}]
  %s5 = inlined_call_operand.vmem [shape: f32[1,512], index: 5, kind: input, shape index: {}]
  %s6 = inlined_call_operand.hbm [shape: bf16[512,128], index: 6, kind: input, shape index: {}]
  %s7 = inlined_call_operand.vmem [shape: f32[1,128], index: 7, kind: input, shape index: {}]
  %s8 = inlined_call_operand.hbm [shape: bf16[32,128], index: 8, kind: output, shape index: {0}]
  %s9 = inlined_call_operand.vmem [shape: f32[2,8,128], index: 9, kind: output, shape index: {1}]
  %10 = xla_tuple %s8, %s9
  %s11 = sld [smem:[#allocation0]]
  $region93: #{_run_train.1} parent=0
    _
  %s13 = ssub.s32 1, %s11
  %s14 = scalar_select 0, %s13, %s11
  $region1: #{_run_train.1} parent=0
    #allocation2 [shape = 'u8[32768]{0}', space=vmem, size = 0x8000, scoped, tag = 'input window, operand 0']
    #allocation3 [shape = 's32[2]{0}', space=sflag, size = 0x8, scoped, tag = 'scoped memory for _run_train.1']
    #allocation4 [shape = 's32[2]{0}', space=sflag, size = 0x8, scoped, tag = 'scoped memory for _run_train.1']
    #allocation5 [shape = 'u8[32768]{0}', space=vmem, size = 0x8000, scoped, tag = 'input window, operand 1']
    #allocation6 [shape = 's32[2]{0}', space=sflag, size = 0x8, scoped, tag = 'scoped memory for _run_train.1']
    #allocation7 [shape = 'u8[524288]{0}', space=vmem, size = 0x80000, scoped, tag = 'input window, operand 3, single buffered']
    #allocation8 [shape = 'u8[524288]{0}', space=vmem, size = 0x80000, scoped, tag = 'input window, operand 4, single buffered']
    #allocation9 [shape = 's32[1]{0}', space=sflag, size = 0x4, scoped, tag = 'scoped memory for _run_train.1']
    #allocation10 [shape = 'u8[131072]{0}', space=vmem, size = 0x20000, scoped, tag = 'input window, operand 6, single buffered']
    #allocation11 [shape = 'u8[8192]{0}', space=vmem, size = 0x2000, scoped, tag = 'output window, operand 0']
    %15 = vsyncpa [#allocation3], 0
    %s16 = scalar_lea.sflag [#allocation3], 1
    %17 = vsyncpa %s16, 0
    %18 = vsyncpa [#allocation6], 0
    %s19 = scalar_lea.sflag [#allocation6], 1
    %20 = vsyncpa %s19, 0
    %21 = vsyncpa [#allocation9], 0
    %22 = vsyncpa [#allocation4], 0
    %s23 = scalar_lea.sflag [#allocation4], 1
    %24 = vsyncpa %s23, 0
    loop: start=0, step=1, limit=4
    $region2: #{_run_train.1} parent=1 // loop_pre_header
      _
    $region3: #{_run_train.1} parent=1 // loop_header
      %s26 = sphi 0, %s30
      %p27 = scmp.ge.s32.totalorder %s26, 4
      %s36 = sphi 0, %s38
      %s39 = sphi 0, %s36
      %s40 = sphi 0, %s39
      %s56 = sphi 0, %s40
      %s62 = sphi 0, %s64
      %s65 = sphi 0, %s62
      %s66 = sphi 0, %s65
      %s82 = sphi 0, %s66
      %s88 = sphi 0, %s90
      %s91 = sphi 0, %s88
      %s92 = sphi 0, %s91
      %s108 = sphi 0, %s92
      %s112 = sphi 0, %s112
      %s114 = sphi 0, %s112
      %s115 = sphi 0, %s114
      %s129 = sphi 0, %s115
      %s133 = sphi 0, %s133
      %s135 = sphi 0, %s133
      %s136 = sphi 0, %s135
      %s150 = sphi 0, %s136
      %s154 = sphi 0, %s154
      %s156 = sphi 0, %s154
      %s157 = sphi 0, %s156
      %s171 = sphi 0, %s157
      %s175 = sphi 0, %s175
      %s177 = sphi 0, %s175
      %s178 = sphi 0, %s177
      %s192 = sphi 0, %s178
      %s196 = sphi 0, %s196
      %s198 = sphi 0, %s196
      %s199 = sphi 0, %s198
      %s213 = sphi 0, %s199
      %s219 = sphi 0, %s221
      %s222 = sphi 0, %s219
      %s223 = sphi 0, %s222
      %s239 = sphi 0, %s223
      %s245 = sphi 0, %s247
      %s248 = sphi 0, %s245
      %s249 = sphi 0, %s248
      %s265 = sphi 0, %s249
    $region4: #{_run_train.1} parent=1 // loop_header_branch
      %29 = sbr.rel (%p27) target = $region8
    $region5: #{_run_train.1} parent=1 // loop_body
      %s31 = ssub.s32 %s26, 1
      %s32 = ssub.s32 %s26, 2
      %s33 = sadd.s32 %s26, 1
      %s34 = ssub.s32 %s26, %s33
      %p35 = scmp.eq.s32.totalorder %s34, 0
      %s37 = sadd.s32 %s36, 1
      %s38 = scalar_select %p35, %s36, %s37
      %p41 = pneg %p35
      %p42 = scmp.eq.s32.totalorder %s26, 1
      %p43 = por %p41, %p42
      %p44 = scmp.ne.s32.totalorder %s36, %s39
      %p45 = scmp.eq.s32.totalorder %s26, 0
      %p46 = por %p44, %p45
      %p47 = scmp.ne.s32.totalorder %s36, %s39
      %p48 = scmp.eq.s32.totalorder %s31, 1
      %p49 = por %p47, %p48
      %p50 = scmp.ne.s32.totalorder %s39, %s40
      %p51 = scmp.eq.s32.totalorder %s31, 0
      %p52 = por %p50, %p51
      %p53 = scmp.ne.s32.totalorder %s39, %s40
      %p54 = scmp.eq.s32.totalorder %s32, 1
      %p55 = por %p53, %p54
      %p57 = scmp.ne.s32.totalorder %s40, %s56
      %p58 = scmp.eq.s32.totalorder %s32, 0
      %p59 = por %p57, %p58
      %s60 = ssub.s32 %s26, %s33
      %p61 = scmp.eq.s32.totalorder %s60, 0
      %s63 = sadd.s32 %s62, 1
      %s64 = scalar_select %p61, %s62, %s63
      %p67 = pneg %p61
      %p68 = scmp.eq.s32.totalorder %s26, 1
      %p69 = por %p67, %p68
      %p70 = scmp.ne.s32.totalorder %s62, %s65
      %p71 = scmp.eq.s32.totalorder %s26, 0
      %p72 = por %p70, %p71
      %p73 = scmp.ne.s32.totalorder %s62, %s65
      %p74 = scmp.eq.s32.totalorder %s31, 1
      %p75 = por %p73, %p74
      %p76 = scmp.ne.s32.totalorder %s65, %s66
      %p77 = scmp.eq.s32.totalorder %s31, 0
      %p78 = por %p76, %p77
      %p79 = scmp.ne.s32.totalorder %s65, %s66
      %p80 = scmp.eq.s32.totalorder %s32, 1
      %p81 = por %p79, %p80
      %p83 = scmp.ne.s32.totalorder %s66, %s82
      %p84 = scmp.eq.s32.totalorder %s32, 0
      %p85 = por %p83, %p84
      %s86 = ssub.s32 %s26, %s33
      %p87 = scmp.eq.s32.totalorder %s86, 0
      %s89 = sadd.s32 %s88, 1
      %s90 = scalar_select %p87, %s88, %s89
      %p93 = pneg %p87
      %p94 = scmp.eq.s32.totalorder %s26, 1
      %p95 = por %p93, %p94
      %p96 = scmp.ne.s32.totalorder %s88, %s91
      %p97 = scmp.eq.s32.totalorder %s26, 0
      %p98 = por %p96, %p97
      %p99 = scmp.ne.s32.totalorder %s88, %s91
      %p100 = scmp.eq.s32.totalorder %s31, 1
      %p101 = por %p99, %p100
      %p102 = scmp.ne.s32.totalorder %s91, %s92
      %p103 = scmp.eq.s32.totalorder %s31, 0
      %p104 = por %p102, %p103
      %p105 = scmp.ne.s32.totalorder %s91, %s92
      %p106 = scmp.eq.s32.totalorder %s32, 1
      %p107 = por %p105, %p106
      %p109 = scmp.ne.s32.totalorder %s92, %s108
      %p110 = scmp.eq.s32.totalorder %s32, 0
      %p111 = por %p109, %p110
      %s113 = sadd.s32 %s112, 1
      %p116 = scmp.eq.s32.totalorder %s26, 1
      %p117 = scmp.ne.s32.totalorder %s112, %s114
      %p118 = scmp.eq.s32.totalorder %s26, 0
      %p119 = por %p117, %p118
      %p120 = scmp.ne.s32.totalorder %s112, %s114
      %p121 = scmp.eq.s32.totalorder %s31, 1
      %p122 = por %p120, %p121
      %p123 = scmp.ne.s32.totalorder %s114, %s115
      %p124 = scmp.eq.s32.totalorder %s31, 0
      %p125 = por %p123, %p124
      %p126 = scmp.ne.s32.totalorder %s114, %s115
      %p127 = scmp.eq.s32.totalorder %s32, 1
      %p128 = por %p126, %p127
      %p130 = scmp.ne.s32.totalorder %s115, %s129
      %p131 = scmp.eq.s32.totalorder %s32, 0
      %p132 = por %p130, %p131
      %s134 = sadd.s32 %s133, 1
      %p137 = scmp.eq.s32.totalorder %s26, 1
      %p138 = scmp.ne.s32.totalorder %s133, %s135
      %p139 = scmp.eq.s32.totalorder %s26, 0
      %p140 = por %p138, %p139
      %p141 = scmp.ne.s32.totalorder %s133, %s135
      %p142 = scmp.eq.s32.totalorder %s31, 1
      %p143 = por %p141, %p142
      %p144 = scmp.ne.s32.totalorder %s135, %s136
      %p145 = scmp.eq.s32.totalorder %s31, 0
      %p146 = por %p144, %p145
      %p147 = scmp.ne.s32.totalorder %s135, %s136
      %p148 = scmp.eq.s32.totalorder %s32, 1
      %p149 = por %p147, %p148
      %p151 = scmp.ne.s32.totalorder %s136, %s150
      %p152 = scmp.eq.s32.totalorder %s32, 0
      %p153 = por %p151, %p152
      %s155 = sadd.s32 %s154, 1
      %p158 = scmp.eq.s32.totalorder %s26, 1
      %p159 = scmp.ne.s32.totalorder %s154, %s156
      %p160 = scmp.eq.s32.totalorder %s26, 0
      %p161 = por %p159, %p160
      %p162 = scmp.ne.s32.totalorder %s154, %s156
      %p163 = scmp.eq.s32.totalorder %s31, 1
      %p164 = por %p162, %p163
      %p165 = scmp.ne.s32.totalorder %s156, %s157
      %p166 = scmp.eq.s32.totalorder %s31, 0
      %p167 = por %p165, %p166
      %p168 = scmp.ne.s32.totalorder %s156, %s157
      %p169 = scmp.eq.s32.totalorder %s32, 1
      %p170 = por %p168, %p169
      %p172 = scmp.ne.s32.totalorder %s157, %s171
      %p173 = scmp.eq.s32.totalorder %s32, 0
      %p174 = por %p172, %p173
      %s176 = sadd.s32 %s175, 1
      %p179 = scmp.eq.s32.totalorder %s26, 1
      %p180 = scmp.ne.s32.totalorder %s175, %s177
      %p181 = scmp.eq.s32.totalorder %s26, 0
      %p182 = por %p180, %p181
      %p183 = scmp.ne.s32.totalorder %s175, %s177
      %p184 = scmp.eq.s32.totalorder %s31, 1
      %p185 = por %p183, %p184
      %p186 = scmp.ne.s32.totalorder %s177, %s178
      %p187 = scmp.eq.s32.totalorder %s31, 0
      %p188 = por %p186, %p187
      %p189 = scmp.ne.s32.totalorder %s177, %s178
      %p190 = scmp.eq.s32.totalorder %s32, 1
      %p191 = por %p189, %p190
      %p193 = scmp.ne.s32.totalorder %s178, %s192
      %p194 = scmp.eq.s32.totalorder %s32, 0
      %p195 = por %p193, %p194
      %s197 = sadd.s32 %s196, 1
      %p200 = scmp.eq.s32.totalorder %s26, 1
      %p201 = scmp.ne.s32.totalorder %s196, %s198
      %p202 = scmp.eq.s32.totalorder %s26, 0
      %p203 = por %p201, %p202
      %p204 = scmp.ne.s32.totalorder %s196, %s198
      %p205 = scmp.eq.s32.totalorder %s31, 1
      %p206 = por %p204, %p205
      %p207 = scmp.ne.s32.totalorder %s198, %s199
      %p208 = scmp.eq.s32.totalorder %s31, 0
      %p209 = por %p207, %p208
      %p210 = scmp.ne.s32.totalorder %s198, %s199
      %p211 = scmp.eq.s32.totalorder %s32, 1
      %p212 = por %p210, %p211
      %p214 = scmp.ne.s32.totalorder %s199, %s213
      %p215 = scmp.eq.s32.totalorder %s32, 0
      %p216 = por %p214, %p215
      %s217 = ssub.s32 %s26, %s33
      %p218 = scmp.eq.s32.totalorder %s217, 0
      %s220 = sadd.s32 %s219, 1
      %s221 = scalar_select %p218, %s219, %s220
      %p224 = pneg %p218
      %p225 = scmp.eq.s32.totalorder %s26, 1
      %p226 = por %p224, %p225
      %p227 = scmp.ne.s32.totalorder %s219, %s222
      %p228 = scmp.eq.s32.totalorder %s26, 0
      %p229 = por %p227, %p228
      %p230 = scmp.ne.s32.totalorder %s219, %s222
      %p231 = scmp.eq.s32.totalorder %s31, 1
      %p232 = por %p230, %p231
      %p233 = scmp.ne.s32.totalorder %s222, %s223
      %p234 = scmp.eq.s32.totalorder %s31, 0
      %p235 = por %p233, %p234
      %p236 = scmp.ne.s32.totalorder %s222, %s223
      %p237 = scmp.eq.s32.totalorder %s32, 1
      %p238 = por %p236, %p237
      %p240 = scmp.ne.s32.totalorder %s223, %s239
      %p241 = scmp.eq.s32.totalorder %s32, 0
      %p242 = por %p240, %p241
      %s243 = ssub.s32 %s26, %s33
      %p244 = scmp.eq.s32.totalorder %s243, 0
      %s246 = sadd.s32 %s245, 1
      %s247 = scalar_select %p244, %s245, %s246
      %p250 = pneg %p244
      %p251 = scmp.eq.s32.totalorder %s26, 1
      %p252 = por %p250, %p251
      %p253 = scmp.ne.s32.totalorder %s245, %s248
      %p254 = scmp.eq.s32.totalorder %s26, 0
      %p255 = por %p253, %p254
      %p256 = scmp.ne.s32.totalorder %s245, %s248
      %p257 = scmp.eq.s32.totalorder %s31, 1
      %p258 = por %p256, %p257
      %p259 = scmp.ne.s32.totalorder %s248, %s249
      %p260 = scmp.eq.s32.totalorder %s31, 0
      %p261 = por %p259, %p260
      %p262 = scmp.ne.s32.totalorder %s248, %s249
      %p263 = scmp.eq.s32.totalorder %s32, 1
      %p264 = por %p262, %p263
      %p266 = scmp.ne.s32.totalorder %s249, %s265
      %p267 = scmp.eq.s32.totalorder %s32, 0
      %p268 = por %p266, %p267
      %p269 = scmp.le.s32.totalorder 1, %s26
      %p270 = scmp.lt.s32.totalorder %s26, 3
      %p271 = pnand %p269, %p270
      %p272 = pneg %p271
      // Predicated region
      $region9: #{_run_train.1} parent=5 // pred_check
        _
      $region10: #{_run_train.1} parent=5 // pred_check_branch
        %274 = sbr.rel (%p271) target = $region12
      $region11: #{_run_train.1} parent=5 // pred_region
        %s275 = ssub.s32 %s26, 1
        // Predicated region
        $region13: #{_run_train.1} parent=11 // pred_check
          %p276 = pneg %p125
        $region14: #{_run_train.1} parent=11 // pred_check_branch
          %278 = sbr.rel (%p276) target = $region16
        $region15: #{_run_train.1} parent=11 // pred_region
          %280 = vsyncadd [#allocation6], 0
          %s281 = sshll.u32 %s3, 4
          %s282 = int_to_ptr.hbm [resolvable:$true] %s281
          %s283 = sshll.u32 [#allocation7], 4
          %s284 = int_to_ptr.vmem [resolvable:$true] %s283
          %289 = dma.hbm_to_vmem [thread:$0]  %s282, 16384, %s284, [#allocation6], 256, 256, 16
        $region16: #{_run_train.1} parent=11 // pred_fallthru
          _
        // Predicated region
        $region17: #{_run_train.1} parent=11 // pred_check
          %p290 = pneg %p146
        $region18: #{_run_train.1} parent=11 // pred_check_branch
          %292 = sbr.rel (%p290) target = $region20
        $region19: #{_run_train.1} parent=11 // pred_region
          %294 = vsyncadd [#allocation9], 0
          %s295 = sshll.u32 %s4, 4
          %s296 = int_to_ptr.hbm [resolvable:$true] %s295
          %s297 = sshll.u32 [#allocation8], 4
          %s298 = int_to_ptr.vmem [resolvable:$true] %s297
          %303 = dma.hbm_to_vmem [thread:$0]  %s296, 16384, %s298, [#allocation9], 256, 256, 16
        $region20: #{_run_train.1} parent=11 // pred_fallthru
          _
        // Predicated region
        $region21: #{_run_train.1} parent=11 // pred_check
          %p304 = pneg %p167
        $region22: #{_run_train.1} parent=11 // pred_check_branch
          %306 = sbr.rel (%p304) target = $region24
        $region23: #{_run_train.1} parent=11 // pred_region
          _
        $region24: #{_run_train.1} parent=11 // pred_fallthru
          _
        // Predicated region
        $region25: #{_run_train.1} parent=11 // pred_check
          %p307 = pneg %p188
        $region26: #{_run_train.1} parent=11 // pred_check_branch
          %309 = sbr.rel (%p307) target = $region28
        $region27: #{_run_train.1} parent=11 // pred_region
          %311 = vsyncadd [#allocation9], 0
          %s312 = sshll.u32 %s6, 4
          %s313 = int_to_ptr.hbm [resolvable:$true] %s312
          %s314 = sshll.u32 [#allocation10], 4
          %s315 = int_to_ptr.vmem [resolvable:$true] %s314
          %320 = dma.hbm_to_vmem [thread:$0]  %s313, 4096, %s315, [#allocation9], 64, 64, 4
        $region28: #{_run_train.1} parent=11 // pred_fallthru
          _
        // Predicated region
        $region29: #{_run_train.1} parent=11 // pred_check
          %p321 = pneg %p209
        $region30: #{_run_train.1} parent=11 // pred_check_branch
          %323 = sbr.rel (%p321) target = $region32
        $region31: #{_run_train.1} parent=11 // pred_region
          _
        $region32: #{_run_train.1} parent=11 // pred_fallthru
          _
      $region12: #{_run_train.1} parent=5 // pred_fallthru
        _
      %p324 = scmp.lt.s32.totalorder %s26, 2
      // Predicated region
      $region33: #{_run_train.1} parent=5 // pred_check
        %p325 = pneg %p324
      $region34: #{_run_train.1} parent=5 // pred_check_branch
        %327 = sbr.rel (%p325) target = $region36
      $region35: #{_run_train.1} parent=5 // pred_region
        // Predicated region
        $region37: #{_run_train.1} parent=35 // pred_check
          %p328 = pneg %p46
        $region38: #{_run_train.1} parent=35 // pred_check_branch
          %330 = sbr.rel (%p328) target = $region40
        $region39: #{_run_train.1} parent=35 // pred_region
          %s331 = sand.u32 %s36, 1
          %s332 = scalar_lea.sflag [#allocation3], %s331
          %s333 = sand.u32 %s36, 1
          %s334 = smul.addr %s333, 32
          %s335 = scalar_lea.vmem [#allocation2], %s334
          %s336 = smul.u32 2, %s26
          %338 = vsyncadd %s332, 0
          %s339 = smul.addr %s336, 4
          %s340 = smul.addr %s339, 4
          %s341 = scalar_lea.hbm %s0, %s340
          %s342 = sshll.u32 %s341, 4
          %s343 = int_to_ptr.hbm [resolvable:$true] %s342
          %s344 = sshll.u32 %s335, 4
          %s345 = int_to_ptr.vmem [resolvable:$true] %s344
          %350 = dma.hbm_to_vmem [thread:$0]  %s343, 512, %s345, %s332, 256, 256, 16
        $region40: #{_run_train.1} parent=35 // pred_fallthru
          _
        // Predicated region
        $region41: #{_run_train.1} parent=35 // pred_check
          %p351 = pneg %p72
        $region42: #{_run_train.1} parent=35 // pred_check_branch
          %353 = sbr.rel (%p351) target = $region44
        $region43: #{_run_train.1} parent=35 // pred_region
          %s354 = sand.u32 %s26, 1
          %s355 = scalar_lea.sflag [#allocation6], %s354
          %s356 = sand.u32 %s62, 1
          %s357 = smul.addr %s356, 32
          %s358 = scalar_lea.vmem [#allocation5], %s357
          %s359 = smul.u32 2, %s26
          %361 = vsyncadd %s355, 0
          %s362 = smul.addr %s359, 4
          %s363 = smul.addr %s362, 4
          %s364 = scalar_lea.hbm %s1, %s363
          %s365 = sshll.u32 %s364, 4
          %s366 = int_to_ptr.hbm [resolvable:$true] %s365
          %s367 = sshll.u32 %s358, 4
          %s368 = int_to_ptr.vmem [resolvable:$true] %s367
          %373 = dma.hbm_to_vmem [thread:$0]  %s366, 512, %s368, %s355, 256, 256, 16
        $region44: #{_run_train.1} parent=35 // pred_fallthru
          _
        // Predicated region
        $region45: #{_run_train.1} parent=35 // pred_check
          %p374 = pneg %p98
        $region46: #{_run_train.1} parent=35 // pred_check_branch
          %376 = sbr.rel (%p374) target = $region48
        $region47: #{_run_train.1} parent=35 // pred_region
          %s377 = smul.u32 2, %s26
          %p378 = scmp.lt.s32.totalorder %s377, 3
          %s379 = scalar_select %p378, %s377, 3
          %s380 = smul.addr %s379, 4
          %s381 = scalar_lea.vmem %s2, %s380
          %s382 = smul.u32 2, %s26
        $region48: #{_run_train.1} parent=35 // pred_fallthru
          _
      $region36: #{_run_train.1} parent=5 // pred_fallthru
        _
      %p383 = scmp.le.s32.totalorder 1, %s26
      %p384 = scmp.lt.s32.totalorder %s26, 3
      %p385 = pnand %p383, %p384
      %p386 = pneg %p385
      // Predicated region
      $region49: #{_run_train.1} parent=5 // pred_check
        _
      $region50: #{_run_train.1} parent=5 // pred_check_branch
        %388 = sbr.rel (%p385) target = $region52
      $region51: #{_run_train.1} parent=5 // pred_region
        %s389 = ssub.s32 %s26, 1
        %s390 = sand.u32 %s39, 1
        %s391 = scalar_lea.sflag [#allocation3], %s390
        %s392 = sand.u32 %s39, 1
        %s393 = smul.addr %s392, 32
        %s394 = scalar_lea.vmem [#allocation2], %s393
        // Predicated region
        $region53: #{_run_train.1} parent=51 // pred_check
          %p395 = pneg %p52
        $region54: #{_run_train.1} parent=51 // pred_check_branch
          %397 = sbr.rel (%p395) target = $region56
        $region55: #{_run_train.1} parent=51 // pred_region
          %399 = dma.done %s391, 512
        $region56: #{_run_train.1} parent=51 // pred_fallthru
          _
        %s400 = sand.u32 %s31, 1
        %s401 = scalar_lea.sflag [#allocation6], %s400
        %s402 = sand.u32 %s65, 1
        %s403 = smul.addr %s402, 32
        %s404 = scalar_lea.vmem [#allocation5], %s403
        // Predicated region
        $region57: #{_run_train.1} parent=51 // pred_check
          %p405 = pneg %p78
        $region58: #{_run_train.1} parent=51 // pred_check_branch
          %407 = sbr.rel (%p405) target = $region60
        $region59: #{_run_train.1} parent=51 // pred_region
          %409 = dma.done %s401, 512
        $region60: #{_run_train.1} parent=51 // pred_fallthru
          _
        // Predicated region
        $region61: #{_run_train.1} parent=51 // pred_check
          %p410 = pneg %p125
        $region62: #{_run_train.1} parent=51 // pred_check_branch
          %412 = sbr.rel (%p410) target = $region64
        $region63: #{_run_train.1} parent=51 // pred_region
          %414 = dma.done [#allocation6], 16384
        $region64: #{_run_train.1} parent=51 // pred_fallthru
          _
        // Predicated region
        $region65: #{_run_train.1} parent=51 // pred_check
          %p415 = pneg %p146
        $region66: #{_run_train.1} parent=51 // pred_check_branch
          %417 = sbr.rel (%p415) target = $region68
        $region67: #{_run_train.1} parent=51 // pred_region
          %419 = dma.done [#allocation9], 16384
        $region68: #{_run_train.1} parent=51 // pred_fallthru
          _
        // Predicated region
        $region69: #{_run_train.1} parent=51 // pred_check
          %p420 = pneg %p188
        $region70: #{_run_train.1} parent=51 // pred_check_branch
          %422 = sbr.rel (%p420) target = $region72
        $region71: #{_run_train.1} parent=51 // pred_region
          %424 = dma.done [#allocation9], 4096
        $region72: #{_run_train.1} parent=51 // pred_fallthru
          _
        %s425 = sand.u32 %s39, 1
        %s426 = scalar_lea.sflag [#allocation3], %s425
        %s427 = sand.u32 %s39, 1
        %s428 = smul.addr %s427, 32
        %s429 = scalar_lea.vmem [#allocation2], %s428
        %p430 = pneg %p52
        %p431 = pneg %p49
        %s432 = sand.u32 %s31, 1
        %s433 = scalar_lea.sflag [#allocation6], %s432
        %s434 = sand.u32 %s65, 1
        %s435 = smul.addr %s434, 32
        %s436 = scalar_lea.vmem [#allocation5], %s435
        %p437 = pneg %p78
        %p438 = pneg %p75
        %s439 = smul.u32 2, %s31
        %p440 = scmp.lt.s32.totalorder %s439, 3
        %s441 = scalar_select %p440, %s439, 3
        %s442 = smul.addr %s441, 4
        %s443 = scalar_lea.vmem %s2, %s442
        %p444 = pneg %p104
        %p445 = pneg %p101
        %p446 = pneg %p125
        %p447 = pneg %p122
        %p448 = pneg %p146
        %p449 = pneg %p143
        %p450 = pneg %p167
        %p451 = pneg %p164
        %p452 = pneg %p188
        %p453 = pneg %p185
        %p454 = pneg %p209
        %p455 = pneg %p206
        %p456 = pneg %p235
        %p457 = pneg %p232
        %s458 = sand.u32 %s222, 1
        %s459 = scalar_lea.sflag [#allocation4], %s458
        %s460 = sand.u32 %s222, 1
        %s461 = smul.addr %s460, 8
        %s462 = scalar_lea.vmem [#allocation11], %s461
        %p463 = pneg %p261
        %p464 = pneg %p258
        %p465 = scmp.lt.s32.totalorder %s31, 1
        %s466 = scalar_select %p465, %s31, 1
        %s467 = smul.addr %s466, 8
        %s468 = scalar_lea.vmem %s9, %s467
        %s469 = smul.u32 2, %s31
        %s470 = smul.u32 2, %s31
        %s471 = smul.u32 2, %s31
        %p472 = scmp.lt.s32.totalorder %s471, 3
        %s473 = scalar_select %p472, %s471, 3
        %s474 = smul.addr %s473, 4
        %s475 = scalar_lea.vmem %s2, %s474
        %s476 = smul.u32 2, %s31
        %s477 = smul.u32 2, %s31
        %p478 = scmp.lt.s32.totalorder %s31, 1
        %s479 = scalar_select %p478, %s31, 1
        %s480 = smul.addr %s479, 8
        %s481 = scalar_lea.vmem %s9, %s480
        %v482 = vld [vmem:[%s394] sm:$0xff]
        %v483 = vld [vmem:[%s394 + $0x8] sm:$0xff]
        %v484 = vld [vmem:[%s394 + $0x10] sm:$0xff]
        %v485 = vld [vmem:[%s394 + $0x18] sm:$0xff]
        %v486 = vld [vmem:[#allocation7] sm:$0xff]
        %v487 = vld [vmem:[#allocation7 + $0x8] sm:$0xff]
        %v488 = vld [vmem:[#allocation7 + $0x10] sm:$0xff]
        %v489 = vld [vmem:[#allocation7 + $0x18] sm:$0xff]
        %v490 = vld [vmem:[#allocation7 + $0x20] sm:$0xff]
        %v491 = vld [vmem:[#allocation7 + $0x28] sm:$0xff]
        %v492 = vld [vmem:[#allocation7 + $0x30] sm:$0xff]
        %v493 = vld [vmem:[#allocation7 + $0x38] sm:$0xff]
        %v494 = vld [vmem:[#allocation7 + $0x40] sm:$0xff]
        %v495 = vld [vmem:[#allocation7 + $0x48] sm:$0xff]
        %v496 = vld [vmem:[#allocation7 + $0x50] sm:$0xff]
        %v497 = vld [vmem:[#allocation7 + $0x58] sm:$0xff]
        %v498 = vld [vmem:[#allocation7 + $0x60] sm:$0xff]
        %v499 = vld [vmem:[#allocation7 + $0x68] sm:$0xff]
        %v500 = vld [vmem:[#allocation7 + $0x70] sm:$0xff]
        %v501 = vld [vmem:[#allocation7 + $0x78] sm:$0xff]
        %v502 = vld [vmem:[#allocation7 + $0x80] sm:$0xff]
        %v503 = vld [vmem:[#allocation7 + $0x88] sm:$0xff]
        %v504 = vld [vmem:[#allocation7 + $0x90] sm:$0xff]
        %v505 = vld [vmem:[#allocation7 + $0x98] sm:$0xff]
        %v506 = vld [vmem:[#allocation7 + $0xa0] sm:$0xff]
        %v507 = vld [vmem:[#allocation7 + $0xa8] sm:$0xff]
        %v508 = vld [vmem:[#allocation7 + $0xb0] sm:$0xff]
        %v509 = vld [vmem:[#allocation7 + $0xb8] sm:$0xff]
        %v510 = vld [vmem:[#allocation7 + $0xc0] sm:$0xff]
        %v511 = vld [vmem:[#allocation7 + $0xc8] sm:$0xff]
        %v512 = vld [vmem:[#allocation7 + $0xd0] sm:$0xff]
        %v513 = vld [vmem:[#allocation7 + $0xd8] sm:$0xff]
        %v514 = vld [vmem:[#allocation7 + $0xe0] sm:$0xff]
        %v515 = vld [vmem:[#allocation7 + $0xe8] sm:$0xff]
        %v516 = vld [vmem:[#allocation7 + $0xf0] sm:$0xff]
        %v517 = vld [vmem:[#allocation7 + $0xf8] sm:$0xff]
        %v518 = vld [vmem:[#allocation7 + $0x100] sm:$0xff]
        %v519 = vld [vmem:[#allocation7 + $0x108] sm:$0xff]
        %v520 = vld [vmem:[#allocation7 + $0x110] sm:$0xff]
        %v521 = vld [vmem:[#allocation7 + $0x118] sm:$0xff]
        %v522 = vld [vmem:[#allocation7 + $0x120] sm:$0xff]
        %v523 = vld [vmem:[#allocation7 + $0x128] sm:$0xff]
        %v524 = vld [vmem:[#allocation7 + $0x130] sm:$0xff]
        %v525 = vld [vmem:[#allocation7 + $0x138] sm:$0xff]
        %v526 = vld [vmem:[#allocation7 + $0x140] sm:$0xff]
        %v527 = vld [vmem:[#allocation7 + $0x148] sm:$0xff]
        %v528 = vld [vmem:[#allocation7 + $0x150] sm:$0xff]
        %v529 = vld [vmem:[#allocation7 + $0x158] sm:$0xff]
        %v530 = vld [vmem:[#allocation7 + $0x160] sm:$0xff]
        %v531 = vld [vmem:[#allocation7 + $0x168] sm:$0xff]
        %v532 = vld [vmem:[#allocation7 + $0x170] sm:$0xff]
        %v533 = vld [vmem:[#allocation7 + $0x178] sm:$0xff]
        %v534 = vld [vmem:[#allocation7 + $0x180] sm:$0xff]
        %v535 = vld [vmem:[#allocation7 + $0x188] sm:$0xff]
        %v536 = vld [vmem:[#allocation7 + $0x190] sm:$0xff]
        %v537 = vld [vmem:[#allocation7 + $0x198] sm:$0xff]
        %v538 = vld [vmem:[#allocation7 + $0x1a0] sm:$0xff]
        %v539 = vld [vmem:[#allocation7 + $0x1a8] sm:$0xff]
        %v540 = vld [vmem:[#allocation7 + $0x1b0] sm:$0xff]
        %v541 = vld [vmem:[#allocation7 + $0x1b8] sm:$0xff]
        %v542 = vld [vmem:[#allocation7 + $0x1c0] sm:$0xff]
        %v543 = vld [vmem:[#allocation7 + $0x1c8] sm:$0xff]
        %v544 = vld [vmem:[#allocation7 + $0x1d0] sm:$0xff]
        %v545 = vld [vmem:[#allocation7 + $0x1d8] sm:$0xff]
        %v546 = vld [vmem:[#allocation7 + $0x1e0] sm:$0xff]
        %v547 = vld [vmem:[#allocation7 + $0x1e8] sm:$0xff]
        %v548 = vld [vmem:[#allocation7 + $0x1f0] sm:$0xff]
        %v549 = vld [vmem:[#allocation7 + $0x1f8] sm:$0xff]
        %v550 = vld [vmem:[#allocation7 + $0x200] sm:$0xff]
        %v551 = vld [vmem:[#allocation7 + $0x208] sm:$0xff]
        %v552 = vld [vmem:[#allocation7 + $0x210] sm:$0xff]
        %v553 = vld [vmem:[#allocation7 + $0x218] sm:$0xff]
        %v554 = vld [vmem:[#allocation7 + $0x220] sm:$0xff]
        %v555 = vld [vmem:[#allocation7 + $0x228] sm:$0xff]
        %v556 = vld [vmem:[#allocation7 + $0x230] sm:$0xff]
        %v557 = vld [vmem:[#allocation7 + $0x238] sm:$0xff]
        %v558 = vld [vmem:[#allocation7 + $0x240] sm:$0xff]
        %v559 = vld [vmem:[#allocation7 + $0x248] sm:$0xff]
        %v560 = vld [vmem:[#allocation7 + $0x250] sm:$0xff]
        %v561 = vld [vmem:[#allocation7 + $0x258] sm:$0xff]
        %v562 = vld [vmem:[#allocation7 + $0x260] sm:$0xff]
        %v563 = vld [vmem:[#allocation7 + $0x268] sm:$0xff]
        %v564 = vld [vmem:[#allocation7 + $0x270] sm:$0xff]
        %v565 = vld [vmem:[#allocation7 + $0x278] sm:$0xff]
        %v566 = vld [vmem:[#allocation7 + $0x280] sm:$0xff]
        %v567 = vld [vmem:[#allocation7 + $0x288] sm:$0xff]
        %v568 = vld [vmem:[#allocation7 + $0x290] sm:$0xff]
        %v569 = vld [vmem:[#allocation7 + $0x298] sm:$0xff]
        %v570 = vld [vmem:[#allocation7 + $0x2a0] sm:$0xff]
        %v571 = vld [vmem:[#allocation7 + $0x2a8] sm:$0xff]
        %v572 = vld [vmem:[#allocation7 + $0x2b0] sm:$0xff]
        %v573 = vld [vmem:[#allocation7 + $0x2b8] sm:$0xff]
        %v574 = vld [vmem:[#allocation7 + $0x2c0] sm:$0xff]
        %v575 = vld [vmem:[#allocation7 + $0x2c8] sm:$0xff]
        %v576 = vld [vmem:[#allocation7 + $0x2d0] sm:$0xff]
        %v577 = vld [vmem:[#allocation7 + $0x2d8] sm:$0xff]
        %v578 = vld [vmem:[#allocation7 + $0x2e0] sm:$0xff]
        %v579 = vld [vmem:[#allocation7 + $0x2e8] sm:$0xff]
        %v580 = vld [vmem:[#allocation7 + $0x2f0] sm:$0xff]
        %v581 = vld [vmem:[#allocation7 + $0x2f8] sm:$0xff]
        %v582 = vld [vmem:[#allocation7 + $0x300] sm:$0xff]
        %v583 = vld [vmem:[#allocation7 + $0x308] sm:$0xff]
        %v584 = vld [vmem:[#allocation7 + $0x310] sm:$0xff]
        %v585 = vld [vmem:[#allocation7 + $0x318] sm:$0xff]
        %v586 = vld [vmem:[#allocation7 + $0x320] sm:$0xff]
        %v587 = vld [vmem:[#allocation7 + $0x328] sm:$0xff]
        %v588 = vld [vmem:[#allocation7 + $0x330] sm:$0xff]
        %v589 = vld [vmem:[#allocation7 + $0x338] sm:$0xff]
        %v590 = vld [vmem:[#allocation7 + $0x340] sm:$0xff]
        %v591 = vld [vmem:[#allocation7 + $0x348] sm:$0xff]
        %v592 = vld [vmem:[#allocation7 + $0x350] sm:$0xff]
        %v593 = vld [vmem:[#allocation7 + $0x358] sm:$0xff]
        %v594 = vld [vmem:[#allocation7 + $0x360] sm:$0xff]
        %v595 = vld [vmem:[#allocation7 + $0x368] sm:$0xff]
        %v596 = vld [vmem:[#allocation7 + $0x370] sm:$0xff]
        %v597 = vld [vmem:[#allocation7 + $0x378] sm:$0xff]
        %v598 = vld [vmem:[#allocation7 + $0x380] sm:$0xff]
        %v599 = vld [vmem:[#allocation7 + $0x388] sm:$0xff]
        %v600 = vld [vmem:[#allocation7 + $0x390] sm:$0xff]
        %v601 = vld [vmem:[#allocation7 + $0x398] sm:$0xff]
        %v602 = vld [vmem:[#allocation7 + $0x3a0] sm:$0xff]
        %v603 = vld [vmem:[#allocation7 + $0x3a8] sm:$0xff]
        %v604 = vld [vmem:[#allocation7 + $0x3b0] sm:$0xff]
        %v605 = vld [vmem:[#allocation7 + $0x3b8] sm:$0xff]
        %v606 = vld [vmem:[#allocation7 + $0x3c0] sm:$0xff]
        %v607 = vld [vmem:[#allocation7 + $0x3c8] sm:$0xff]
        %v608 = vld [vmem:[#allocation7 + $0x3d0] sm:$0xff]
        %v609 = vld [vmem:[#allocation7 + $0x3d8] sm:$0xff]
        %v610 = vld [vmem:[#allocation7 + $0x3e0] sm:$0xff]
        %v611 = vld [vmem:[#allocation7 + $0x3e8] sm:$0xff]
        %v612 = vld [vmem:[#allocation7 + $0x3f0] sm:$0xff]
        %v613 = vld [vmem:[#allocation7 + $0x3f8] sm:$0xff]
        %v614 = vld [vmem:[%s404] sm:$0xff]
        %v615 = vld [vmem:[%s404 + $0x8] sm:$0xff]
        %v616 = vld [vmem:[%s404 + $0x10] sm:$0xff]
        %v617 = vld [vmem:[%s404 + $0x18] sm:$0xff]
        %v618 = vld [vmem:[#allocation8] sm:$0xff]
        %v619 = vld [vmem:[#allocation8 + $0x8] sm:$0xff]
        %v620 = vld [vmem:[#allocation8 + $0x10] sm:$0xff]
        %v621 = vld [vmem:[#allocation8 + $0x18] sm:$0xff]
        %v622 = vld [vmem:[#allocation8 + $0x20] sm:$0xff]
        %v623 = vld [vmem:[#allocation8 + $0x28] sm:$0xff]
        %v624 = vld [vmem:[#allocation8 + $0x30] sm:$0xff]
        %v625 = vld [vmem:[#allocation8 + $0x38] sm:$0xff]
        %v626 = vld [vmem:[#allocation8 + $0x40] sm:$0xff]
        %v627 = vld [vmem:[#allocation8 + $0x48] sm:$0xff]
        %v628 = vld [vmem:[#allocation8 + $0x50] sm:$0xff]
        %v629 = vld [vmem:[#allocation8 + $0x58] sm:$0xff]
        %v630 = vld [vmem:[#allocation8 + $0x60] sm:$0xff]
        %v631 = vld [vmem:[#allocation8 + $0x68] sm:$0xff]
        %v632 = vld [vmem:[#allocation8 + $0x70] sm:$0xff]
        %v633 = vld [vmem:[#allocation8 + $0x78] sm:$0xff]
        %v634 = vld [vmem:[#allocation8 + $0x80] sm:$0xff]
        %v635 = vld [vmem:[#allocation8 + $0x88] sm:$0xff]
        %v636 = vld [vmem:[#allocation8 + $0x90] sm:$0xff]
        %v637 = vld [vmem:[#allocation8 + $0x98] sm:$0xff]
        %v638 = vld [vmem:[#allocation8 + $0xa0] sm:$0xff]
        %v639 = vld [vmem:[#allocation8 + $0xa8] sm:$0xff]
        %v640 = vld [vmem:[#allocation8 + $0xb0] sm:$0xff]
        %v641 = vld [vmem:[#allocation8 + $0xb8] sm:$0xff]
        %v642 = vld [vmem:[#allocation8 + $0xc0] sm:$0xff]
        %v643 = vld [vmem:[#allocation8 + $0xc8] sm:$0xff]
        %v644 = vld [vmem:[#allocation8 + $0xd0] sm:$0xff]
        %v645 = vld [vmem:[#allocation8 + $0xd8] sm:$0xff]
        %v646 = vld [vmem:[#allocation8 + $0xe0] sm:$0xff]
        %v647 = vld [vmem:[#allocation8 + $0xe8] sm:$0xff]
        %v648 = vld [vmem:[#allocation8 + $0xf0] sm:$0xff]
        %v649 = vld [vmem:[#allocation8 + $0xf8] sm:$0xff]
        %v650 = vld [vmem:[#allocation8 + $0x100] sm:$0xff]
        %v651 = vld [vmem:[#allocation8 + $0x108] sm:$0xff]
        %v652 = vld [vmem:[#allocation8 + $0x110] sm:$0xff]
        %v653 = vld [vmem:[#allocation8 + $0x118] sm:$0xff]
        %v654 = vld [vmem:[#allocation8 + $0x120] sm:$0xff]
        %v655 = vld [vmem:[#allocation8 + $0x128] sm:$0xff]
        %v656 = vld [vmem:[#allocation8 + $0x130] sm:$0xff]
        %v657 = vld [vmem:[#allocation8 + $0x138] sm:$0xff]
        %v658 = vld [vmem:[#allocation8 + $0x140] sm:$0xff]
        %v659 = vld [vmem:[#allocation8 + $0x148] sm:$0xff]
        %v660 = vld [vmem:[#allocation8 + $0x150] sm:$0xff]
        %v661 = vld [vmem:[#allocation8 + $0x158] sm:$0xff]
        %v662 = vld [vmem:[#allocation8 + $0x160] sm:$0xff]
        %v663 = vld [vmem:[#allocation8 + $0x168] sm:$0xff]
        %v664 = vld [vmem:[#allocation8 + $0x170] sm:$0xff]
        %v665 = vld [vmem:[#allocation8 + $0x178] sm:$0xff]
        %v666 = vld [vmem:[#allocation8 + $0x180] sm:$0xff]
        %v667 = vld [vmem:[#allocation8 + $0x188] sm:$0xff]
        %v668 = vld [vmem:[#allocation8 + $0x190] sm:$0xff]
        %v669 = vld [vmem:[#allocation8 + $0x198] sm:$0xff]
        %v670 = vld [vmem:[#allocation8 + $0x1a0] sm:$0xff]
        %v671 = vld [vmem:[#allocation8 + $0x1a8] sm:$0xff]
        %v672 = vld [vmem:[#allocation8 + $0x1b0] sm:$0xff]
        %v673 = vld [vmem:[#allocation8 + $0x1b8] sm:$0xff]
        %v674 = vld [vmem:[#allocation8 + $0x1c0] sm:$0xff]
        %v675 = vld [vmem:[#allocation8 + $0x1c8] sm:$0xff]
        %v676 = vld [vmem:[#allocation8 + $0x1d0] sm:$0xff]
        %v677 = vld [vmem:[#allocation8 + $0x1d8] sm:$0xff]
        %v678 = vld [vmem:[#allocation8 + $0x1e0] sm:$0xff]
        %v679 = vld [vmem:[#allocation8 + $0x1e8] sm:$0xff]
        %v680 = vld [vmem:[#allocation8 + $0x1f0] sm:$0xff]
        %v681 = vld [vmem:[#allocation8 + $0x1f8] sm:$0xff]
        %v682 = vld [vmem:[#allocation8 + $0x200] sm:$0xff]
        %v683 = vld [vmem:[#allocation8 + $0x208] sm:$0xff]
        %v684 = vld [vmem:[#allocation8 + $0x210] sm:$0xff]
        %v685 = vld [vmem:[#allocation8 + $0x218] sm:$0xff]
        %v686 = vld [vmem:[#allocation8 + $0x220] sm:$0xff]
        %v687 = vld [vmem:[#allocation8 + $0x228] sm:$0xff]
        %v688 = vld [vmem:[#allocation8 + $0x230] sm:$0xff]
        %v689 = vld [vmem:[#allocation8 + $0x238] sm:$0xff]
        %v690 = vld [vmem:[#allocation8 + $0x240] sm:$0xff]
        %v691 = vld [vmem:[#allocation8 + $0x248] sm:$0xff]
        %v692 = vld [vmem:[#allocation8 + $0x250] sm:$0xff]
        %v693 = vld [vmem:[#allocation8 + $0x258] sm:$0xff]
        %v694 = vld [vmem:[#allocation8 + $0x260] sm:$0xff]
        %v695 = vld [vmem:[#allocation8 + $0x268] sm:$0xff]
        %v696 = vld [vmem:[#allocation8 + $0x270] sm:$0xff]
        %v697 = vld [vmem:[#allocation8 + $0x278] sm:$0xff]
        %v698 = vld [vmem:[#allocation8 + $0x280] sm:$0xff]
        %v699 = vld [vmem:[#allocation8 + $0x288] sm:$0xff]
        %v700 = vld [vmem:[#allocation8 + $0x290] sm:$0xff]
        %v701 = vld [vmem:[#allocation8 + $0x298] sm:$0xff]
        %v702 = vld [vmem:[#allocation8 + $0x2a0] sm:$0xff]
        %v703 = vld [vmem:[#allocation8 + $0x2a8] sm:$0xff]
        %v704 = vld [vmem:[#allocation8 + $0x2b0] sm:$0xff]
        %v705 = vld [vmem:[#allocation8 + $0x2b8] sm:$0xff]
        %v706 = vld [vmem:[#allocation8 + $0x2c0] sm:$0xff]
        %v707 = vld [vmem:[#allocation8 + $0x2c8] sm:$0xff]
        %v708 = vld [vmem:[#allocation8 + $0x2d0] sm:$0xff]
        %v709 = vld [vmem:[#allocation8 + $0x2d8] sm:$0xff]
        %v710 = vld [vmem:[#allocation8 + $0x2e0] sm:$0xff]
        %v711 = vld [vmem:[#allocation8 + $0x2e8] sm:$0xff]
        %v712 = vld [vmem:[#allocation8 + $0x2f0] sm:$0xff]
        %v713 = vld [vmem:[#allocation8 + $0x2f8] sm:$0xff]
        %v714 = vld [vmem:[#allocation8 + $0x300] sm:$0xff]
        %v715 = vld [vmem:[#allocation8 + $0x308] sm:$0xff]
        %v716 = vld [vmem:[#allocation8 + $0x310] sm:$0xff]
        %v717 = vld [vmem:[#allocation8 + $0x318] sm:$0xff]
        %v718 = vld [vmem:[#allocation8 + $0x320] sm:$0xff]
        %v719 = vld [vmem:[#allocation8 + $0x328] sm:$0xff]
        %v720 = vld [vmem:[#allocation8 + $0x330] sm:$0xff]
        %v721 = vld [vmem:[#allocation8 + $0x338] sm:$0xff]
        %v722 = vld [vmem:[#allocation8 + $0x340] sm:$0xff]
        %v723 = vld [vmem:[#allocation8 + $0x348] sm:$0xff]
        %v724 = vld [vmem:[#allocation8 + $0x350] sm:$0xff]
        %v725 = vld [vmem:[#allocation8 + $0x358] sm:$0xff]
        %v726 = vld [vmem:[#allocation8 + $0x360] sm:$0xff]
        %v727 = vld [vmem:[#allocation8 + $0x368] sm:$0xff]
        %v728 = vld [vmem:[#allocation8 + $0x370] sm:$0xff]
        %v729 = vld [vmem:[#allocation8 + $0x378] sm:$0xff]
        %v730 = vld [vmem:[#allocation8 + $0x380] sm:$0xff]
        %v731 = vld [vmem:[#allocation8 + $0x388] sm:$0xff]
        %v732 = vld [vmem:[#allocation8 + $0x390] sm:$0xff]
        %v733 = vld [vmem:[#allocation8 + $0x398] sm:$0xff]
        %v734 = vld [vmem:[#allocation8 + $0x3a0] sm:$0xff]
        %v735 = vld [vmem:[#allocation8 + $0x3a8] sm:$0xff]
        %v736 = vld [vmem:[#allocation8 + $0x3b0] sm:$0xff]
        %v737 = vld [vmem:[#allocation8 + $0x3b8] sm:$0xff]
        %v738 = vld [vmem:[#allocation8 + $0x3c0] sm:$0xff]
        %v739 = vld [vmem:[#allocation8 + $0x3c8] sm:$0xff]
        %v740 = vld [vmem:[#allocation8 + $0x3d0] sm:$0xff]
        %v741 = vld [vmem:[#allocation8 + $0x3d8] sm:$0xff]
        %v742 = vld [vmem:[#allocation8 + $0x3e0] sm:$0xff]
        %v743 = vld [vmem:[#allocation8 + $0x3e8] sm:$0xff]
        %v744 = vld [vmem:[#allocation8 + $0x3f0] sm:$0xff]
        %v745 = vld [vmem:[#allocation8 + $0x3f8] sm:$0xff]
        %v750 = vunpack.c.l.b16 %v614
        %v751 = vunpack.c.h.b16 %v614
        %v752 = vunpack.c.l.b16 %v615
        %v753 = vunpack.c.h.b16 %v615
        %v754 = vunpack.c.l.b16 %v616
        %v755 = vunpack.c.h.b16 %v616
        %v756 = vunpack.c.l.b16 %v617
        %v757 = vunpack.c.h.b16 %v617
        %v758 = vpack.c.b16 %v754, %v750
        %v759 = vpack.c.b16 %v755, %v751
        %v760 = vpack.c.b16 %v756, %v752
        %v761 = vpack.c.b16 %v757, %v753
        %v894 = vunpack.c.l.b16 %v618
        %v895 = vunpack.c.h.b16 %v618
        %v896 = vunpack.c.l.b16 %v619
        %v897 = vunpack.c.h.b16 %v619
        %v898 = vunpack.c.l.b16 %v620
        %v899 = vunpack.c.h.b16 %v620
        %v900 = vunpack.c.l.b16 %v621
        %v901 = vunpack.c.h.b16 %v621
        %v902 = vunpack.c.l.b16 %v622
        %v903 = vunpack.c.h.b16 %v622
        %v904 = vunpack.c.l.b16 %v623
        %v905 = vunpack.c.h.b16 %v623
        %v906 = vunpack.c.l.b16 %v624
        %v907 = vunpack.c.h.b16 %v624
        %v908 = vunpack.c.l.b16 %v625
        %v909 = vunpack.c.h.b16 %v625
        %v910 = vunpack.c.l.b16 %v626
        %v911 = vunpack.c.h.b16 %v626
        %v912 = vunpack.c.l.b16 %v627
        %v913 = vunpack.c.h.b16 %v627
        %v914 = vunpack.c.l.b16 %v628
        %v915 = vunpack.c.h.b16 %v628
        %v916 = vunpack.c.l.b16 %v629
        %v917 = vunpack.c.h.b16 %v629
        %v918 = vunpack.c.l.b16 %v630
        %v919 = vunpack.c.h.b16 %v630
        %v920 = vunpack.c.l.b16 %v631
        %v921 = vunpack.c.h.b16 %v631
        %v922 = vunpack.c.l.b16 %v632
        %v923 = vunpack.c.h.b16 %v632
        %v924 = vunpack.c.l.b16 %v633
        %v925 = vunpack.c.h.b16 %v633
        %v926 = vunpack.c.l.b16 %v634
        %v927 = vunpack.c.h.b16 %v634
        %v928 = vunpack.c.l.b16 %v635
        %v929 = vunpack.c.h.b16 %v635
        %v930 = vunpack.c.l.b16 %v636
        %v931 = vunpack.c.h.b16 %v636
        %v932 = vunpack.c.l.b16 %v637
        %v933 = vunpack.c.h.b16 %v637
        %v934 = vunpack.c.l.b16 %v638
        %v935 = vunpack.c.h.b16 %v638
        %v936 = vunpack.c.l.b16 %v639
        %v937 = vunpack.c.h.b16 %v639
        %v938 = vunpack.c.l.b16 %v640
        %v939 = vunpack.c.h.b16 %v640
        %v940 = vunpack.c.l.b16 %v641
        %v941 = vunpack.c.h.b16 %v641
        %v942 = vunpack.c.l.b16 %v642
        %v943 = vunpack.c.h.b16 %v642
        %v944 = vunpack.c.l.b16 %v643
        %v945 = vunpack.c.h.b16 %v643
        %v946 = vunpack.c.l.b16 %v644
        %v947 = vunpack.c.h.b16 %v644
        %v948 = vunpack.c.l.b16 %v645
        %v949 = vunpack.c.h.b16 %v645
        %v950 = vunpack.c.l.b16 %v646
        %v951 = vunpack.c.h.b16 %v646
        %v952 = vunpack.c.l.b16 %v647
        %v953 = vunpack.c.h.b16 %v647
        %v954 = vunpack.c.l.b16 %v648
        %v955 = vunpack.c.h.b16 %v648
        %v956 = vunpack.c.l.b16 %v649
        %v957 = vunpack.c.h.b16 %v649
        %v958 = vunpack.c.l.b16 %v650
        %v959 = vunpack.c.h.b16 %v650
        %v960 = vunpack.c.l.b16 %v651
        %v961 = vunpack.c.h.b16 %v651
        %v962 = vunpack.c.l.b16 %v652
        %v963 = vunpack.c.h.b16 %v652
        %v964 = vunpack.c.l.b16 %v653
        %v965 = vunpack.c.h.b16 %v653
        %v966 = vunpack.c.l.b16 %v654
        %v967 = vunpack.c.h.b16 %v654
        %v968 = vunpack.c.l.b16 %v655
        %v969 = vunpack.c.h.b16 %v655
        %v970 = vunpack.c.l.b16 %v656
        %v971 = vunpack.c.h.b16 %v656
        %v972 = vunpack.c.l.b16 %v657
        %v973 = vunpack.c.h.b16 %v657
        %v974 = vunpack.c.l.b16 %v658
        %v975 = vunpack.c.h.b16 %v658
        %v976 = vunpack.c.l.b16 %v659
        %v977 = vunpack.c.h.b16 %v659
        %v978 = vunpack.c.l.b16 %v660
        %v979 = vunpack.c.h.b16 %v660
        %v980 = vunpack.c.l.b16 %v661
        %v981 = vunpack.c.h.b16 %v661
        %v982 = vunpack.c.l.b16 %v662
        %v983 = vunpack.c.h.b16 %v662
        %v984 = vunpack.c.l.b16 %v663
        %v985 = vunpack.c.h.b16 %v663
        %v986 = vunpack.c.l.b16 %v664
        %v987 = vunpack.c.h.b16 %v664
        %v988 = vunpack.c.l.b16 %v665
        %v989 = vunpack.c.h.b16 %v665
        %v990 = vunpack.c.l.b16 %v666
        %v991 = vunpack.c.h.b16 %v666
        %v992 = vunpack.c.l.b16 %v667
        %v993 = vunpack.c.h.b16 %v667
        %v994 = vunpack.c.l.b16 %v668
        %v995 = vunpack.c.h.b16 %v668
        %v996 = vunpack.c.l.b16 %v669
        %v997 = vunpack.c.h.b16 %v669
        %v998 = vunpack.c.l.b16 %v670
        %v999 = vunpack.c.h.b16 %v670
        %v1000 = vunpack.c.l.b16 %v671
        %v1001 = vunpack.c.h.b16 %v671
        %v1002 = vunpack.c.l.b16 %v672
        %v1003 = vunpack.c.h.b16 %v672
        %v1004 = vunpack.c.l.b16 %v673
        %v1005 = vunpack.c.h.b16 %v673
        %v1006 = vunpack.c.l.b16 %v674
        %v1007 = vunpack.c.h.b16 %v674
        %v1008 = vunpack.c.l.b16 %v675
        %v1009 = vunpack.c.h.b16 %v675
        %v1010 = vunpack.c.l.b16 %v676
        %v1011 = vunpack.c.h.b16 %v676
        %v1012 = vunpack.c.l.b16 %v677
        %v1013 = vunpack.c.h.b16 %v677
        %v1014 = vunpack.c.l.b16 %v678
        %v1015 = vunpack.c.h.b16 %v678
        %v1016 = vunpack.c.l.b16 %v679
        %v1017 = vunpack.c.h.b16 %v679
        %v1018 = vunpack.c.l.b16 %v680
        %v1019 = vunpack.c.h.b16 %v680
        %v1020 = vunpack.c.l.b16 %v681
        %v1021 = vunpack.c.h.b16 %v681
        %v1022 = vunpack.c.l.b16 %v682
        %v1023 = vunpack.c.h.b16 %v682
        %v1024 = vunpack.c.l.b16 %v683
        %v1025 = vunpack.c.h.b16 %v683
        %v1026 = vunpack.c.l.b16 %v684
        %v1027 = vunpack.c.h.b16 %v684
        %v1028 = vunpack.c.l.b16 %v685
        %v1029 = vunpack.c.h.b16 %v685
        %v1030 = vunpack.c.l.b16 %v686
        %v1031 = vunpack.c.h.b16 %v686
        %v1032 = vunpack.c.l.b16 %v687
        %v1033 = vunpack.c.h.b16 %v687
        %v1034 = vunpack.c.l.b16 %v688
        %v1035 = vunpack.c.h.b16 %v688
        %v1036 = vunpack.c.l.b16 %v689
        %v1037 = vunpack.c.h.b16 %v689
        %v1038 = vunpack.c.l.b16 %v690
        %v1039 = vunpack.c.h.b16 %v690
        %v1040 = vunpack.c.l.b16 %v691
        %v1041 = vunpack.c.h.b16 %v691
        %v1042 = vunpack.c.l.b16 %v692
        %v1043 = vunpack.c.h.b16 %v692
        %v1044 = vunpack.c.l.b16 %v693
        %v1045 = vunpack.c.h.b16 %v693
        %v1046 = vunpack.c.l.b16 %v694
        %v1047 = vunpack.c.h.b16 %v694
        %v1048 = vunpack.c.l.b16 %v695
        %v1049 = vunpack.c.h.b16 %v695
        %v1050 = vunpack.c.l.b16 %v696
        %v1051 = vunpack.c.h.b16 %v696
        %v1052 = vunpack.c.l.b16 %v697
        %v1053 = vunpack.c.h.b16 %v697
        %v1054 = vunpack.c.l.b16 %v698
        %v1055 = vunpack.c.h.b16 %v698
        %v1056 = vunpack.c.l.b16 %v699
        %v1057 = vunpack.c.h.b16 %v699
        %v1058 = vunpack.c.l.b16 %v700
        %v1059 = vunpack.c.h.b16 %v700
        %v1060 = vunpack.c.l.b16 %v701
        %v1061 = vunpack.c.h.b16 %v701
        %v1062 = vunpack.c.l.b16 %v702
        %v1063 = vunpack.c.h.b16 %v702
        %v1064 = vunpack.c.l.b16 %v703
        %v1065 = vunpack.c.h.b16 %v703
        %v1066 = vunpack.c.l.b16 %v704
        %v1067 = vunpack.c.h.b16 %v704
        %v1068 = vunpack.c.l.b16 %v705
        %v1069 = vunpack.c.h.b16 %v705
        %v1070 = vunpack.c.l.b16 %v706
        %v1071 = vunpack.c.h.b16 %v706
        %v1072 = vunpack.c.l.b16 %v707
        %v1073 = vunpack.c.h.b16 %v707
        %v1074 = vunpack.c.l.b16 %v708
        %v1075 = vunpack.c.h.b16 %v708
        %v1076 = vunpack.c.l.b16 %v709
        %v1077 = vunpack.c.h.b16 %v709
        %v1078 = vunpack.c.l.b16 %v710
        %v1079 = vunpack.c.h.b16 %v710
        %v1080 = vunpack.c.l.b16 %v711
        %v1081 = vunpack.c.h.b16 %v711
        %v1082 = vunpack.c.l.b16 %v712
        %v1083 = vunpack.c.h.b16 %v712
        %v1084 = vunpack.c.l.b16 %v713
        %v1085 = vunpack.c.h.b16 %v713
        %v1086 = vunpack.c.l.b16 %v714
        %v1087 = vunpack.c.h.b16 %v714
        %v1088 = vunpack.c.l.b16 %v715
        %v1089 = vunpack.c.h.b16 %v715
        %v1090 = vunpack.c.l.b16 %v716
        %v1091 = vunpack.c.h.b16 %v716
        %v1092 = vunpack.c.l.b16 %v717
        %v1093 = vunpack.c.h.b16 %v717
        %v1094 = vunpack.c.l.b16 %v718
        %v1095 = vunpack.c.h.b16 %v718
        %v1096 = vunpack.c.l.b16 %v719
        %v1097 = vunpack.c.h.b16 %v719
        %v1098 = vunpack.c.l.b16 %v720
        %v1099 = vunpack.c.h.b16 %v720
        %v1100 = vunpack.c.l.b16 %v721
        %v1101 = vunpack.c.h.b16 %v721
        %v1102 = vunpack.c.l.b16 %v722
        %v1103 = vunpack.c.h.b16 %v722
        %v1104 = vunpack.c.l.b16 %v723
        %v1105 = vunpack.c.h.b16 %v723
        %v1106 = vunpack.c.l.b16 %v724
        %v1107 = vunpack.c.h.b16 %v724
        %v1108 = vunpack.c.l.b16 %v725
        %v1109 = vunpack.c.h.b16 %v725
        %v1110 = vunpack.c.l.b16 %v726
        %v1111 = vunpack.c.h.b16 %v726
        %v1112 = vunpack.c.l.b16 %v727
        %v1113 = vunpack.c.h.b16 %v727
        %v1114 = vunpack.c.l.b16 %v728
        %v1115 = vunpack.c.h.b16 %v728
        %v1116 = vunpack.c.l.b16 %v729
        %v1117 = vunpack.c.h.b16 %v729
        %v1118 = vunpack.c.l.b16 %v730
        %v1119 = vunpack.c.h.b16 %v730
        %v1120 = vunpack.c.l.b16 %v731
        %v1121 = vunpack.c.h.b16 %v731
        %v1122 = vunpack.c.l.b16 %v732
        %v1123 = vunpack.c.h.b16 %v732
        %v1124 = vunpack.c.l.b16 %v733
        %v1125 = vunpack.c.h.b16 %v733
        %v1126 = vunpack.c.l.b16 %v734
        %v1127 = vunpack.c.h.b16 %v734
        %v1128 = vunpack.c.l.b16 %v735
        %v1129 = vunpack.c.h.b16 %v735
        %v1130 = vunpack.c.l.b16 %v736
        %v1131 = vunpack.c.h.b16 %v736
        %v1132 = vunpack.c.l.b16 %v737
        %v1133 = vunpack.c.h.b16 %v737
        %v1134 = vunpack.c.l.b16 %v738
        %v1135 = vunpack.c.h.b16 %v738
        %v1136 = vunpack.c.l.b16 %v739
        %v1137 = vunpack.c.h.b16 %v739
        %v1138 = vunpack.c.l.b16 %v740
        %v1139 = vunpack.c.h.b16 %v740
        %v1140 = vunpack.c.l.b16 %v741
        %v1141 = vunpack.c.h.b16 %v741
        %v1142 = vunpack.c.l.b16 %v742
        %v1143 = vunpack.c.h.b16 %v742
        %v1144 = vunpack.c.l.b16 %v743
        %v1145 = vunpack.c.h.b16 %v743
        %v1146 = vunpack.c.l.b16 %v744
        %v1147 = vunpack.c.h.b16 %v744
        %v1148 = vunpack.c.l.b16 %v745
        %v1149 = vunpack.c.h.b16 %v745
        %v1150 = vpack.c.b16 %v898, %v894
        %v1151 = vpack.c.b16 %v899, %v895
        %v1152 = vpack.c.b16 %v900, %v896
        %v1153 = vpack.c.b16 %v901, %v897
        %v1154 = vpack.c.b16 %v906, %v902
        %v1155 = vpack.c.b16 %v907, %v903
        %v1156 = vpack.c.b16 %v908, %v904
        %v1157 = vpack.c.b16 %v909, %v905
        %v1158 = vpack.c.b16 %v914, %v910
        %v1159 = vpack.c.b16 %v915, %v911
        %v1160 = vpack.c.b16 %v916, %v912
        %v1161 = vpack.c.b16 %v917, %v913
        %v1162 = vpack.c.b16 %v922, %v918
        %v1163 = vpack.c.b16 %v923, %v919
        %v1164 = vpack.c.b16 %v924, %v920
        %v1165 = vpack.c.b16 %v925, %v921
        %v1166 = vpack.c.b16 %v930, %v926
        %v1167 = vpack.c.b16 %v931, %v927
        %v1168 = vpack.c.b16 %v932, %v928
        %v1169 = vpack.c.b16 %v933, %v929
        %v1170 = vpack.c.b16 %v938, %v934
        %v1171 = vpack.c.b16 %v939, %v935
        %v1172 = vpack.c.b16 %v940, %v936
        %v1173 = vpack.c.b16 %v941, %v937
        %v1174 = vpack.c.b16 %v946, %v942
        %v1175 = vpack.c.b16 %v947, %v943
        %v1176 = vpack.c.b16 %v948, %v944
        %v1177 = vpack.c.b16 %v949, %v945
        %v1178 = vpack.c.b16 %v954, %v950
        %v1179 = vpack.c.b16 %v955, %v951
        %v1180 = vpack.c.b16 %v956, %v952
        %v1181 = vpack.c.b16 %v957, %v953
        %v1182 = vpack.c.b16 %v962, %v958
        %v1183 = vpack.c.b16 %v963, %v959
        %v1184 = vpack.c.b16 %v964, %v960
        %v1185 = vpack.c.b16 %v965, %v961
        %v1186 = vpack.c.b16 %v970, %v966
        %v1187 = vpack.c.b16 %v971, %v967
        %v1188 = vpack.c.b16 %v972, %v968
        %v1189 = vpack.c.b16 %v973, %v969
        %v1190 = vpack.c.b16 %v978, %v974
        %v1191 = vpack.c.b16 %v979, %v975
        %v1192 = vpack.c.b16 %v980, %v976
        %v1193 = vpack.c.b16 %v981, %v977
        %v1194 = vpack.c.b16 %v986, %v982
        %v1195 = vpack.c.b16 %v987, %v983
        %v1196 = vpack.c.b16 %v988, %v984
        %v1197 = vpack.c.b16 %v989, %v985
        %v1198 = vpack.c.b16 %v994, %v990
        %v1199 = vpack.c.b16 %v995, %v991
        %v1200 = vpack.c.b16 %v996, %v992
        %v1201 = vpack.c.b16 %v997, %v993
        %v1202 = vpack.c.b16 %v1002, %v998
        %v1203 = vpack.c.b16 %v1003, %v999
        %v1204 = vpack.c.b16 %v1004, %v1000
        %v1205 = vpack.c.b16 %v1005, %v1001
        %v1206 = vpack.c.b16 %v1010, %v1006
        %v1207 = vpack.c.b16 %v1011, %v1007
        %v1208 = vpack.c.b16 %v1012, %v1008
        %v1209 = vpack.c.b16 %v1013, %v1009
        %v1210 = vpack.c.b16 %v1018, %v1014
        %v1211 = vpack.c.b16 %v1019, %v1015
        %v1212 = vpack.c.b16 %v1020, %v1016
        %v1213 = vpack.c.b16 %v1021, %v1017
        %v1214 = vpack.c.b16 %v1026, %v1022
        %v1215 = vpack.c.b16 %v1027, %v1023
        %v1216 = vpack.c.b16 %v1028, %v1024
        %v1217 = vpack.c.b16 %v1029, %v1025
        %v1218 = vpack.c.b16 %v1034, %v1030
        %v1219 = vpack.c.b16 %v1035, %v1031
        %v1220 = vpack.c.b16 %v1036, %v1032
        %v1221 = vpack.c.b16 %v1037, %v1033
        %v1222 = vpack.c.b16 %v1042, %v1038
        %v1223 = vpack.c.b16 %v1043, %v1039
        %v1224 = vpack.c.b16 %v1044, %v1040
        %v1225 = vpack.c.b16 %v1045, %v1041
        %v1226 = vpack.c.b16 %v1050, %v1046
        %v1227 = vpack.c.b16 %v1051, %v1047
        %v1228 = vpack.c.b16 %v1052, %v1048
        %v1229 = vpack.c.b16 %v1053, %v1049
        %v1230 = vpack.c.b16 %v1058, %v1054
        %v1231 = vpack.c.b16 %v1059, %v1055
        %v1232 = vpack.c.b16 %v1060, %v1056
        %v1233 = vpack.c.b16 %v1061, %v1057
        %v1234 = vpack.c.b16 %v1066, %v1062
        %v1235 = vpack.c.b16 %v1067, %v1063
        %v1236 = vpack.c.b16 %v1068, %v1064
        %v1237 = vpack.c.b16 %v1069, %v1065
        %v1238 = vpack.c.b16 %v1074, %v1070
        %v1239 = vpack.c.b16 %v1075, %v1071
        %v1240 = vpack.c.b16 %v1076, %v1072
        %v1241 = vpack.c.b16 %v1077, %v1073
        %v1242 = vpack.c.b16 %v1082, %v1078
        %v1243 = vpack.c.b16 %v1083, %v1079
        %v1244 = vpack.c.b16 %v1084, %v1080
        %v1245 = vpack.c.b16 %v1085, %v1081
        %v1246 = vpack.c.b16 %v1090, %v1086
        %v1247 = vpack.c.b16 %v1091, %v1087
        %v1248 = vpack.c.b16 %v1092, %v1088
        %v1249 = vpack.c.b16 %v1093, %v1089
        %v1250 = vpack.c.b16 %v1098, %v1094
        %v1251 = vpack.c.b16 %v1099, %v1095
        %v1252 = vpack.c.b16 %v1100, %v1096
        %v1253 = vpack.c.b16 %v1101, %v1097
        %v1254 = vpack.c.b16 %v1106, %v1102
        %v1255 = vpack.c.b16 %v1107, %v1103
        %v1256 = vpack.c.b16 %v1108, %v1104
        %v1257 = vpack.c.b16 %v1109, %v1105
        %v1258 = vpack.c.b16 %v1114, %v1110
        %v1259 = vpack.c.b16 %v1115, %v1111
        %v1260 = vpack.c.b16 %v1116, %v1112
        %v1261 = vpack.c.b16 %v1117, %v1113
        %v1262 = vpack.c.b16 %v1122, %v1118
        %v1263 = vpack.c.b16 %v1123, %v1119
        %v1264 = vpack.c.b16 %v1124, %v1120
        %v1265 = vpack.c.b16 %v1125, %v1121
        %v1266 = vpack.c.b16 %v1130, %v1126
        %v1267 = vpack.c.b16 %v1131, %v1127
        %v1268 = vpack.c.b16 %v1132, %v1128
        %v1269 = vpack.c.b16 %v1133, %v1129
        %v1270 = vpack.c.b16 %v1138, %v1134
        %v1271 = vpack.c.b16 %v1139, %v1135
        %v1272 = vpack.c.b16 %v1140, %v1136
        %v1273 = vpack.c.b16 %v1141, %v1137
        %v1274 = vpack.c.b16 %v1146, %v1142
        %v1275 = vpack.c.b16 %v1147, %v1143
        %v1276 = vpack.c.b16 %v1148, %v1144
        %v1277 = vpack.c.b16 %v1149, %v1145
        %1406 = vmatpush.bf16.msra.mxu0 %v1178
        %1407 = vmatpush.bf16.msra.mxu0 %v1174
        %1408 = vmatpush.bf16.msra.mxu0 %v1170
        %1409 = vmatpush.bf16.msra.mxu0 %v1166
        %1410 = vmatpush.bf16.msra.mxu0 %v1162
        %1411 = vmatpush.bf16.msra.mxu0 %v1158
        %1412 = vmatpush.bf16.msra.mxu0 %v1154
        %1413 = vmatpush.bf16.msra.mxu0 %v1150
        %1414 = vmatmul.bf16.gmra.mxu0 %v758
        %v1415 = vpop.f32.mrf.mxu0
        %v1416 = vadd.f32 0.0, %v1415
        %v1417 = vpop.f32.mrf.mxu0
        %v1418 = vadd.f32 0.0, %v1417
        %1419 = vdwg.mxu0
        %1420 = vmatpush.bf16.msra.mxu0 %v1210
        %1421 = vmatpush.bf16.msra.mxu0 %v1206
        %1422 = vmatpush.bf16.msra.mxu0 %v1202
        %1423 = vmatpush.bf16.msra.mxu0 %v1198
        %1424 = vmatpush.bf16.msra.mxu0 %v1194
        %1425 = vmatpush.bf16.msra.mxu0 %v1190
        %1426 = vmatpush.bf16.msra.mxu0 %v1186
        %1427 = vmatpush.bf16.msra.mxu0 %v1182
        %1428 = vmatmul.bf16.gmra.mxu0 %v759
        %v1429 = vpop.f32.mrf.mxu0
        %v1430 = vadd.f32 %v1416, %v1429
        %v1431 = vpop.f32.mrf.mxu0
        %v1432 = vadd.f32 %v1418, %v1431
        %1433 = vdwg.mxu0
        %1434 = vmatpush.bf16.msra.mxu0 %v1242
        %1435 = vmatpush.bf16.msra.mxu0 %v1238
        %1436 = vmatpush.bf16.msra.mxu0 %v1234
        %1437 = vmatpush.bf16.msra.mxu0 %v1230
        %1438 = vmatpush.bf16.msra.mxu0 %v1226
        %1439 = vmatpush.bf16.msra.mxu0 %v1222
        %1440 = vmatpush.bf16.msra.mxu0 %v1218
        %1441 = vmatpush.bf16.msra.mxu0 %v1214
        %1442 = vmatmul.bf16.gmra.mxu0 %v760
        %v1443 = vpop.f32.mrf.mxu0
        %v1444 = vadd.f32 %v1430, %v1443
        %v1445 = vpop.f32.mrf.mxu0
        %v1446 = vadd.f32 %v1432, %v1445
        %1447 = vdwg.mxu0
        %1448 = vmatpush.bf16.msra.mxu0 %v1274
        %1449 = vmatpush.bf16.msra.mxu0 %v1270
        %1450 = vmatpush.bf16.msra.mxu0 %v1266
        %1451 = vmatpush.bf16.msra.mxu0 %v1262
        %1452 = vmatpush.bf16.msra.mxu0 %v1258
        %1453 = vmatpush.bf16.msra.mxu0 %v1254
        %1454 = vmatpush.bf16.msra.mxu0 %v1250
        %1455 = vmatpush.bf16.msra.mxu0 %v1246
        %1456 = vmatmul.bf16.gmra.mxu0 %v761
        %v1457 = vpop.f32.mrf.mxu0
        %v1458 = vadd.f32 %v1444, %v1457
        %v1459 = vpop.f32.mrf.mxu0
        %v1460 = vadd.f32 %v1446, %v1459
        %1461 = vdwg.mxu0
        %1462 = vmatpush.bf16.msra.mxu0 %v1179
        %1463 = vmatpush.bf16.msra.mxu0 %v1175
        %1464 = vmatpush.bf16.msra.mxu0 %v1171
        %1465 = vmatpush.bf16.msra.mxu0 %v1167
        %1466 = vmatpush.bf16.msra.mxu0 %v1163
        %1467 = vmatpush.bf16.msra.mxu0 %v1159
        %1468 = vmatpush.bf16.msra.mxu0 %v1155
        %1469 = vmatpush.bf16.msra.mxu0 %v1151
        %1470 = vmatmul.bf16.gmra.mxu0 %v758
        %v1471 = vpop.f32.mrf.mxu0
        %v1472 = vadd.f32 0.0, %v1471
        %v1473 = vpop.f32.mrf.mxu0
        %v1474 = vadd.f32 0.0, %v1473
        %1475 = vdwg.mxu0
        %1476 = vmatpush.bf16.msra.mxu0 %v1211
        %1477 = vmatpush.bf16.msra.mxu0 %v1207
        %1478 = vmatpush.bf16.msra.mxu0 %v1203
        %1479 = vmatpush.bf16.msra.mxu0 %v1199
        %1480 = vmatpush.bf16.msra.mxu0 %v1195
        %1481 = vmatpush.bf16.msra.mxu0 %v1191
        %1482 = vmatpush.bf16.msra.mxu0 %v1187
        %1483 = vmatpush.bf16.msra.mxu0 %v1183
        %1484 = vmatmul.bf16.gmra.mxu0 %v759
        %v1485 = vpop.f32.mrf.mxu0
        %v1486 = vadd.f32 %v1472, %v1485
        %v1487 = vpop.f32.mrf.mxu0
        %v1488 = vadd.f32 %v1474, %v1487
        %1489 = vdwg.mxu0
        %1490 = vmatpush.bf16.msra.mxu0 %v1243
        %1491 = vmatpush.bf16.msra.mxu0 %v1239
        %1492 = vmatpush.bf16.msra.mxu0 %v1235
        %1493 = vmatpush.bf16.msra.mxu0 %v1231
        %1494 = vmatpush.bf16.msra.mxu0 %v1227
        %1495 = vmatpush.bf16.msra.mxu0 %v1223
        %1496 = vmatpush.bf16.msra.mxu0 %v1219
        %1497 = vmatpush.bf16.msra.mxu0 %v1215
        %1498 = vmatmul.bf16.gmra.mxu0 %v760
        %v1499 = vpop.f32.mrf.mxu0
        %v1500 = vadd.f32 %v1486, %v1499
        %v1501 = vpop.f32.mrf.mxu0
        %v1502 = vadd.f32 %v1488, %v1501
        %1503 = vdwg.mxu0
        %1504 = vmatpush.bf16.msra.mxu0 %v1275
        %1505 = vmatpush.bf16.msra.mxu0 %v1271
        %1506 = vmatpush.bf16.msra.mxu0 %v1267
        %1507 = vmatpush.bf16.msra.mxu0 %v1263
        %1508 = vmatpush.bf16.msra.mxu0 %v1259
        %1509 = vmatpush.bf16.msra.mxu0 %v1255
        %1510 = vmatpush.bf16.msra.mxu0 %v1251
        %1511 = vmatpush.bf16.msra.mxu0 %v1247
        %1512 = vmatmul.bf16.gmra.mxu0 %v761
        %v1513 = vpop.f32.mrf.mxu0
        %v1514 = vadd.f32 %v1500, %v1513
        %v1515 = vpop.f32.mrf.mxu0
        %v1516 = vadd.f32 %v1502, %v1515
        %1517 = vdwg.mxu0
        %1518 = vmatpush.bf16.msra.mxu0 %v1180
        %1519 = vmatpush.bf16.msra.mxu0 %v1176
        %1520 = vmatpush.bf16.msra.mxu0 %v1172
        %1521 = vmatpush.bf16.msra.mxu0 %v1168
        %1522 = vmatpush.bf16.msra.mxu0 %v1164
        %1523 = vmatpush.bf16.msra.mxu0 %v1160
        %1524 = vmatpush.bf16.msra.mxu0 %v1156
        %1525 = vmatpush.bf16.msra.mxu0 %v1152
        %1526 = vmatmul.bf16.gmra.mxu0 %v758
        %v1527 = vpop.f32.mrf.mxu0
        %v1528 = vadd.f32 0.0, %v1527
        %v1529 = vpop.f32.mrf.mxu0
        %v1530 = vadd.f32 0.0, %v1529
        %1531 = vdwg.mxu0
        %1532 = vmatpush.bf16.msra.mxu0 %v1212
        %1533 = vmatpush.bf16.msra.mxu0 %v1208
        %1534 = vmatpush.bf16.msra.mxu0 %v1204
        %1535 = vmatpush.bf16.msra.mxu0 %v1200
        %1536 = vmatpush.bf16.msra.mxu0 %v1196
        %1537 = vmatpush.bf16.msra.mxu0 %v1192
        %1538 = vmatpush.bf16.msra.mxu0 %v1188
        %1539 = vmatpush.bf16.msra.mxu0 %v1184
        %1540 = vmatmul.bf16.gmra.mxu0 %v759
        %v1541 = vpop.f32.mrf.mxu0
        %v1542 = vadd.f32 %v1528, %v1541
        %v1543 = vpop.f32.mrf.mxu0
        %v1544 = vadd.f32 %v1530, %v1543
        %1545 = vdwg.mxu0
        %1546 = vmatpush.bf16.msra.mxu0 %v1244
        %1547 = vmatpush.bf16.msra.mxu0 %v1240
        %1548 = vmatpush.bf16.msra.mxu0 %v1236
        %1549 = vmatpush.bf16.msra.mxu0 %v1232
        %1550 = vmatpush.bf16.msra.mxu0 %v1228
        %1551 = vmatpush.bf16.msra.mxu0 %v1224
        %1552 = vmatpush.bf16.msra.mxu0 %v1220
        %1553 = vmatpush.bf16.msra.mxu0 %v1216
        %1554 = vmatmul.bf16.gmra.mxu0 %v760
        %v1555 = vpop.f32.mrf.mxu0
        %v1556 = vadd.f32 %v1542, %v1555
        %v1557 = vpop.f32.mrf.mxu0
        %v1558 = vadd.f32 %v1544, %v1557
        %1559 = vdwg.mxu0
        %1560 = vmatpush.bf16.msra.mxu0 %v1276
        %1561 = vmatpush.bf16.msra.mxu0 %v1272
        %1562 = vmatpush.bf16.msra.mxu0 %v1268
        %1563 = vmatpush.bf16.msra.mxu0 %v1264
        %1564 = vmatpush.bf16.msra.mxu0 %v1260
        %1565 = vmatpush.bf16.msra.mxu0 %v1256
        %1566 = vmatpush.bf16.msra.mxu0 %v1252
        %1567 = vmatpush.bf16.msra.mxu0 %v1248
        %1568 = vmatmul.bf16.gmra.mxu0 %v761
        %v1569 = vpop.f32.mrf.mxu0
        %v1570 = vadd.f32 %v1556, %v1569
        %v1571 = vpop.f32.mrf.mxu0
        %v1572 = vadd.f32 %v1558, %v1571
        %1573 = vdwg.mxu0
        %1574 = vmatpush.bf16.msra.mxu0 %v1181
        %1575 = vmatpush.bf16.msra.mxu0 %v1177
        %1576 = vmatpush.bf16.msra.mxu0 %v1173
        %1577 = vmatpush.bf16.msra.mxu0 %v1169
        %1578 = vmatpush.bf16.msra.mxu0 %v1165
        %1579 = vmatpush.bf16.msra.mxu0 %v1161
        %1580 = vmatpush.bf16.msra.mxu0 %v1157
        %1581 = vmatpush.bf16.msra.mxu0 %v1153
        %1582 = vmatmul.bf16.gmra.mxu0 %v758
        %v1583 = vpop.f32.mrf.mxu0
        %v1584 = vadd.f32 0.0, %v1583
        %v1585 = vpop.f32.mrf.mxu0
        %v1586 = vadd.f32 0.0, %v1585
        %1587 = vdwg.mxu0
        %1588 = vmatpush.bf16.msra.mxu0 %v1213
        %1589 = vmatpush.bf16.msra.mxu0 %v1209
        %1590 = vmatpush.bf16.msra.mxu0 %v1205
        %1591 = vmatpush.bf16.msra.mxu0 %v1201
        %1592 = vmatpush.bf16.msra.mxu0 %v1197
        %1593 = vmatpush.bf16.msra.mxu0 %v1193
        %1594 = vmatpush.bf16.msra.mxu0 %v1189
        %1595 = vmatpush.bf16.msra.mxu0 %v1185
        %1596 = vmatmul.bf16.gmra.mxu0 %v759
        %v1597 = vpop.f32.mrf.mxu0
        %v1598 = vadd.f32 %v1584, %v1597
        %v1599 = vpop.f32.mrf.mxu0
        %v1600 = vadd.f32 %v1586, %v1599
        %1601 = vdwg.mxu0
        %1602 = vmatpush.bf16.msra.mxu0 %v1245
        %1603 = vmatpush.bf16.msra.mxu0 %v1241
        %1604 = vmatpush.bf16.msra.mxu0 %v1237
        %1605 = vmatpush.bf16.msra.mxu0 %v1233
        %1606 = vmatpush.bf16.msra.mxu0 %v1229
        %1607 = vmatpush.bf16.msra.mxu0 %v1225
        %1608 = vmatpush.bf16.msra.mxu0 %v1221
        %1609 = vmatpush.bf16.msra.mxu0 %v1217
        %1610 = vmatmul.bf16.gmra.mxu0 %v760
        %v1611 = vpop.f32.mrf.mxu0
        %v1612 = vadd.f32 %v1598, %v1611
        %v1613 = vpop.f32.mrf.mxu0
        %v1614 = vadd.f32 %v1600, %v1613
        %1615 = vdwg.mxu0
        %1616 = vmatpush.bf16.msra.mxu0 %v1277
        %1617 = vmatpush.bf16.msra.mxu0 %v1273
        %1618 = vmatpush.bf16.msra.mxu0 %v1269
        %1619 = vmatpush.bf16.msra.mxu0 %v1265
        %1620 = vmatpush.bf16.msra.mxu0 %v1261
        %1621 = vmatpush.bf16.msra.mxu0 %v1257
        %1622 = vmatpush.bf16.msra.mxu0 %v1253
        %1623 = vmatpush.bf16.msra.mxu0 %v1249
        %1624 = vmatmul.bf16.gmra.mxu0 %v761
        %v1625 = vpop.f32.mrf.mxu0
        %v1626 = vadd.f32 %v1612, %v1625
        %v1627 = vpop.f32.mrf.mxu0
        %v1628 = vadd.f32 %v1614, %v1627
        %1629 = vdwg.mxu0
        %v1634 = vunpack.c.l.b16 %v482
        %v1635 = vunpack.c.h.b16 %v482
        %v1636 = vunpack.c.l.b16 %v483
        %v1637 = vunpack.c.h.b16 %v483
        %v1638 = vunpack.c.l.b16 %v484
        %v1639 = vunpack.c.h.b16 %v484
        %v1640 = vunpack.c.l.b16 %v485
        %v1641 = vunpack.c.h.b16 %v485
        %v1642 = vpack.c.b16 %v1638, %v1634
        %v1643 = vpack.c.b16 %v1639, %v1635
        %v1644 = vpack.c.b16 %v1640, %v1636
        %v1645 = vpack.c.b16 %v1641, %v1637
        %v1778 = vunpack.c.l.b16 %v486
        %v1779 = vunpack.c.h.b16 %v486
        %v1780 = vunpack.c.l.b16 %v487
        %v1781 = vunpack.c.h.b16 %v487
        %v1782 = vunpack.c.l.b16 %v488
        %v1783 = vunpack.c.h.b16 %v488
        %v1784 = vunpack.c.l.b16 %v489
        %v1785 = vunpack.c.h.b16 %v489
        %v1786 = vunpack.c.l.b16 %v490
        %v1787 = vunpack.c.h.b16 %v490
        %v1788 = vunpack.c.l.b16 %v491
        %v1789 = vunpack.c.h.b16 %v491
        %v1790 = vunpack.c.l.b16 %v492
        %v1791 = vunpack.c.h.b16 %v492
        %v1792 = vunpack.c.l.b16 %v493
        %v1793 = vunpack.c.h.b16 %v493
        %v1794 = vunpack.c.l.b16 %v494
        %v1795 = vunpack.c.h.b16 %v494
        %v1796 = vunpack.c.l.b16 %v495
        %v1797 = vunpack.c.h.b16 %v495
        %v1798 = vunpack.c.l.b16 %v496
        %v1799 = vunpack.c.h.b16 %v496
        %v1800 = vunpack.c.l.b16 %v497
        %v1801 = vunpack.c.h.b16 %v497
        %v1802 = vunpack.c.l.b16 %v498
        %v1803 = vunpack.c.h.b16 %v498
        %v1804 = vunpack.c.l.b16 %v499
        %v1805 = vunpack.c.h.b16 %v499
        %v1806 = vunpack.c.l.b16 %v500
        %v1807 = vunpack.c.h.b16 %v500
        %v1808 = vunpack.c.l.b16 %v501
        %v1809 = vunpack.c.h.b16 %v501
        %v1810 = vunpack.c.l.b16 %v502
        %v1811 = vunpack.c.h.b16 %v502
        %v1812 = vunpack.c.l.b16 %v503
        %v1813 = vunpack.c.h.b16 %v503
        %v1814 = vunpack.c.l.b16 %v504
        %v1815 = vunpack.c.h.b16 %v504
        %v1816 = vunpack.c.l.b16 %v505
        %v1817 = vunpack.c.h.b16 %v505
        %v1818 = vunpack.c.l.b16 %v506
        %v1819 = vunpack.c.h.b16 %v506
        %v1820 = vunpack.c.l.b16 %v507
        %v1821 = vunpack.c.h.b16 %v507
        %v1822 = vunpack.c.l.b16 %v508
        %v1823 = vunpack.c.h.b16 %v508
        %v1824 = vunpack.c.l.b16 %v509
        %v1825 = vunpack.c.h.b16 %v509
        %v1826 = vunpack.c.l.b16 %v510
        %v1827 = vunpack.c.h.b16 %v510
        %v1828 = vunpack.c.l.b16 %v511
        %v1829 = vunpack.c.h.b16 %v511
        %v1830 = vunpack.c.l.b16 %v512
        %v1831 = vunpack.c.h.b16 %v512
        %v1832 = vunpack.c.l.b16 %v513
        %v1833 = vunpack.c.h.b16 %v513
        %v1834 = vunpack.c.l.b16 %v514
        %v1835 = vunpack.c.h.b16 %v514
        %v1836 = vunpack.c.l.b16 %v515
        %v1837 = vunpack.c.h.b16 %v515
        %v1838 = vunpack.c.l.b16 %v516
        %v1839 = vunpack.c.h.b16 %v516
        %v1840 = vunpack.c.l.b16 %v517
        %v1841 = vunpack.c.h.b16 %v517
        %v1842 = vunpack.c.l.b16 %v518
        %v1843 = vunpack.c.h.b16 %v518
        %v1844 = vunpack.c.l.b16 %v519
        %v1845 = vunpack.c.h.b16 %v519
        %v1846 = vunpack.c.l.b16 %v520
        %v1847 = vunpack.c.h.b16 %v520
        %v1848 = vunpack.c.l.b16 %v521
        %v1849 = vunpack.c.h.b16 %v521
        %v1850 = vunpack.c.l.b16 %v522
        %v1851 = vunpack.c.h.b16 %v522
        %v1852 = vunpack.c.l.b16 %v523
        %v1853 = vunpack.c.h.b16 %v523
        %v1854 = vunpack.c.l.b16 %v524
        %v1855 = vunpack.c.h.b16 %v524
        %v1856 = vunpack.c.l.b16 %v525
        %v1857 = vunpack.c.h.b16 %v525
        %v1858 = vunpack.c.l.b16 %v526
        %v1859 = vunpack.c.h.b16 %v526
        %v1860 = vunpack.c.l.b16 %v527
        %v1861 = vunpack.c.h.b16 %v527
        %v1862 = vunpack.c.l.b16 %v528
        %v1863 = vunpack.c.h.b16 %v528
        %v1864 = vunpack.c.l.b16 %v529
        %v1865 = vunpack.c.h.b16 %v529
        %v1866 = vunpack.c.l.b16 %v530
        %v1867 = vunpack.c.h.b16 %v530
        %v1868 = vunpack.c.l.b16 %v531
        %v1869 = vunpack.c.h.b16 %v531
        %v1870 = vunpack.c.l.b16 %v532
        %v1871 = vunpack.c.h.b16 %v532
        %v1872 = vunpack.c.l.b16 %v533
        %v1873 = vunpack.c.h.b16 %v533
        %v1874 = vunpack.c.l.b16 %v534
        %v1875 = vunpack.c.h.b16 %v534
        %v1876 = vunpack.c.l.b16 %v535
        %v1877 = vunpack.c.h.b16 %v535
        %v1878 = vunpack.c.l.b16 %v536
        %v1879 = vunpack.c.h.b16 %v536
        %v1880 = vunpack.c.l.b16 %v537
        %v1881 = vunpack.c.h.b16 %v537
        %v1882 = vunpack.c.l.b16 %v538
        %v1883 = vunpack.c.h.b16 %v538
        %v1884 = vunpack.c.l.b16 %v539
        %v1885 = vunpack.c.h.b16 %v539
        %v1886 = vunpack.c.l.b16 %v540
        %v1887 = vunpack.c.h.b16 %v540
        %v1888 = vunpack.c.l.b16 %v541
        %v1889 = vunpack.c.h.b16 %v541
        %v1890 = vunpack.c.l.b16 %v542
        %v1891 = vunpack.c.h.b16 %v542
        %v1892 = vunpack.c.l.b16 %v543
        %v1893 = vunpack.c.h.b16 %v543
        %v1894 = vunpack.c.l.b16 %v544
        %v1895 = vunpack.c.h.b16 %v544
        %v1896 = vunpack.c.l.b16 %v545
        %v1897 = vunpack.c.h.b16 %v545
        %v1898 = vunpack.c.l.b16 %v546
        %v1899 = vunpack.c.h.b16 %v546
        %v1900 = vunpack.c.l.b16 %v547
        %v1901 = vunpack.c.h.b16 %v547
        %v1902 = vunpack.c.l.b16 %v548
        %v1903 = vunpack.c.h.b16 %v548
        %v1904 = vunpack.c.l.b16 %v549
        %v1905 = vunpack.c.h.b16 %v549
        %v1906 = vunpack.c.l.b16 %v550
        %v1907 = vunpack.c.h.b16 %v550
        %v1908 = vunpack.c.l.b16 %v551
        %v1909 = vunpack.c.h.b16 %v551
        %v1910 = vunpack.c.l.b16 %v552
        %v1911 = vunpack.c.h.b16 %v552
        %v1912 = vunpack.c.l.b16 %v553
        %v1913 = vunpack.c.h.b16 %v553
        %v1914 = vunpack.c.l.b16 %v554
        %v1915 = vunpack.c.h.b16 %v554
        %v1916 = vunpack.c.l.b16 %v555
        %v1917 = vunpack.c.h.b16 %v555
        %v1918 = vunpack.c.l.b16 %v556
        %v1919 = vunpack.c.h.b16 %v556
        %v1920 = vunpack.c.l.b16 %v557
        %v1921 = vunpack.c.h.b16 %v557
        %v1922 = vunpack.c.l.b16 %v558
        %v1923 = vunpack.c.h.b16 %v558
        %v1924 = vunpack.c.l.b16 %v559
        %v1925 = vunpack.c.h.b16 %v559
        %v1926 = vunpack.c.l.b16 %v560
        %v1927 = vunpack.c.h.b16 %v560
        %v1928 = vunpack.c.l.b16 %v561
        %v1929 = vunpack.c.h.b16 %v561
        %v1930 = vunpack.c.l.b16 %v562
        %v1931 = vunpack.c.h.b16 %v562
        %v1932 = vunpack.c.l.b16 %v563
        %v1933 = vunpack.c.h.b16 %v563
        %v1934 = vunpack.c.l.b16 %v564
        %v1935 = vunpack.c.h.b16 %v564
        %v1936 = vunpack.c.l.b16 %v565
        %v1937 = vunpack.c.h.b16 %v565
        %v1938 = vunpack.c.l.b16 %v566
        %v1939 = vunpack.c.h.b16 %v566
        %v1940 = vunpack.c.l.b16 %v567
        %v1941 = vunpack.c.h.b16 %v567
        %v1942 = vunpack.c.l.b16 %v568
        %v1943 = vunpack.c.h.b16 %v568
        %v1944 = vunpack.c.l.b16 %v569
        %v1945 = vunpack.c.h.b16 %v569
        %v1946 = vunpack.c.l.b16 %v570
        %v1947 = vunpack.c.h.b16 %v570
        %v1948 = vunpack.c.l.b16 %v571
        %v1949 = vunpack.c.h.b16 %v571
        %v1950 = vunpack.c.l.b16 %v572
        %v1951 = vunpack.c.h.b16 %v572
        %v1952 = vunpack.c.l.b16 %v573
        %v1953 = vunpack.c.h.b16 %v573
        %v1954 = vunpack.c.l.b16 %v574
        %v1955 = vunpack.c.h.b16 %v574
        %v1956 = vunpack.c.l.b16 %v575
        %v1957 = vunpack.c.h.b16 %v575
        %v1958 = vunpack.c.l.b16 %v576
        %v1959 = vunpack.c.h.b16 %v576
        %v1960 = vunpack.c.l.b16 %v577
        %v1961 = vunpack.c.h.b16 %v577
        %v1962 = vunpack.c.l.b16 %v578
        %v1963 = vunpack.c.h.b16 %v578
        %v1964 = vunpack.c.l.b16 %v579
        %v1965 = vunpack.c.h.b16 %v579
        %v1966 = vunpack.c.l.b16 %v580
        %v1967 = vunpack.c.h.b16 %v580
        %v1968 = vunpack.c.l.b16 %v581
        %v1969 = vunpack.c.h.b16 %v581
        %v1970 = vunpack.c.l.b16 %v582
        %v1971 = vunpack.c.h.b16 %v582
        %v1972 = vunpack.c.l.b16 %v583
        %v1973 = vunpack.c.h.b16 %v583
        %v1974 = vunpack.c.l.b16 %v584
        %v1975 = vunpack.c.h.b16 %v584
        %v1976 = vunpack.c.l.b16 %v585
        %v1977 = vunpack.c.h.b16 %v585
        %v1978 = vunpack.c.l.b16 %v586
        %v1979 = vunpack.c.h.b16 %v586
        %v1980 = vunpack.c.l.b16 %v587
        %v1981 = vunpack.c.h.b16 %v587
        %v1982 = vunpack.c.l.b16 %v588
        %v1983 = vunpack.c.h.b16 %v588
        %v1984 = vunpack.c.l.b16 %v589
        %v1985 = vunpack.c.h.b16 %v589
        %v1986 = vunpack.c.l.b16 %v590
        %v1987 = vunpack.c.h.b16 %v590
        %v1988 = vunpack.c.l.b16 %v591
        %v1989 = vunpack.c.h.b16 %v591
        %v1990 = vunpack.c.l.b16 %v592
        %v1991 = vunpack.c.h.b16 %v592
        %v1992 = vunpack.c.l.b16 %v593
        %v1993 = vunpack.c.h.b16 %v593
        %v1994 = vunpack.c.l.b16 %v594
        %v1995 = vunpack.c.h.b16 %v594
        %v1996 = vunpack.c.l.b16 %v595
        %v1997 = vunpack.c.h.b16 %v595
        %v1998 = vunpack.c.l.b16 %v596
        %v1999 = vunpack.c.h.b16 %v596
        %v2000 = vunpack.c.l.b16 %v597
        %v2001 = vunpack.c.h.b16 %v597
        %v2002 = vunpack.c.l.b16 %v598
        %v2003 = vunpack.c.h.b16 %v598
        %v2004 = vunpack.c.l.b16 %v599
        %v2005 = vunpack.c.h.b16 %v599
        %v2006 = vunpack.c.l.b16 %v600
        %v2007 = vunpack.c.h.b16 %v600
        %v2008 = vunpack.c.l.b16 %v601
        %v2009 = vunpack.c.h.b16 %v601
        %v2010 = vunpack.c.l.b16 %v602
        %v2011 = vunpack.c.h.b16 %v602
        %v2012 = vunpack.c.l.b16 %v603
        %v2013 = vunpack.c.h.b16 %v603
        %v2014 = vunpack.c.l.b16 %v604
        %v2015 = vunpack.c.h.b16 %v604
        %v2016 = vunpack.c.l.b16 %v605
        %v2017 = vunpack.c.h.b16 %v605
        %v2018 = vunpack.c.l.b16 %v606
        %v2019 = vunpack.c.h.b16 %v606
        %v2020 = vunpack.c.l.b16 %v607
        %v2021 = vunpack.c.h.b16 %v607
        %v2022 = vunpack.c.l.b16 %v608
        %v2023 = vunpack.c.h.b16 %v608
        %v2024 = vunpack.c.l.b16 %v609
        %v2025 = vunpack.c.h.b16 %v609
        %v2026 = vunpack.c.l.b16 %v610
        %v2027 = vunpack.c.h.b16 %v610
        %v2028 = vunpack.c.l.b16 %v611
        %v2029 = vunpack.c.h.b16 %v611
        %v2030 = vunpack.c.l.b16 %v612
        %v2031 = vunpack.c.h.b16 %v612
        %v2032 = vunpack.c.l.b16 %v613
        %v2033 = vunpack.c.h.b16 %v613
        %v2034 = vpack.c.b16 %v1782, %v1778
        %v2035 = vpack.c.b16 %v1783, %v1779
        %v2036 = vpack.c.b16 %v1784, %v1780
        %v2037 = vpack.c.b16 %v1785, %v1781
        %v2038 = vpack.c.b16 %v1790, %v1786
        %v2039 = vpack.c.b16 %v1791, %v1787
        %v2040 = vpack.c.b16 %v1792, %v1788
        %v2041 = vpack.c.b16 %v1793, %v1789
        %v2042 = vpack.c.b16 %v1798, %v1794
        %v2043 = vpack.c.b16 %v1799, %v1795
        %v2044 = vpack.c.b16 %v1800, %v1796
        %v2045 = vpack.c.b16 %v1801, %v1797
        %v2046 = vpack.c.b16 %v1806, %v1802
        %v2047 = vpack.c.b16 %v1807, %v1803
        %v2048 = vpack.c.b16 %v1808, %v1804
        %v2049 = vpack.c.b16 %v1809, %v1805
        %v2050 = vpack.c.b16 %v1814, %v1810
        %v2051 = vpack.c.b16 %v1815, %v1811
        %v2052 = vpack.c.b16 %v1816, %v1812
        %v2053 = vpack.c.b16 %v1817, %v1813
        %v2054 = vpack.c.b16 %v1822, %v1818
        %v2055 = vpack.c.b16 %v1823, %v1819
        %v2056 = vpack.c.b16 %v1824, %v1820
        %v2057 = vpack.c.b16 %v1825, %v1821
        %v2058 = vpack.c.b16 %v1830, %v1826
        %v2059 = vpack.c.b16 %v1831, %v1827
        %v2060 = vpack.c.b16 %v1832, %v1828
        %v2061 = vpack.c.b16 %v1833, %v1829
        %v2062 = vpack.c.b16 %v1838, %v1834
        %v2063 = vpack.c.b16 %v1839, %v1835
        %v2064 = vpack.c.b16 %v1840, %v1836
        %v2065 = vpack.c.b16 %v1841, %v1837
        %v2066 = vpack.c.b16 %v1846, %v1842
        %v2067 = vpack.c.b16 %v1847, %v1843
        %v2068 = vpack.c.b16 %v1848, %v1844
        %v2069 = vpack.c.b16 %v1849, %v1845
        %v2070 = vpack.c.b16 %v1854, %v1850
        %v2071 = vpack.c.b16 %v1855, %v1851
        %v2072 = vpack.c.b16 %v1856, %v1852
        %v2073 = vpack.c.b16 %v1857, %v1853
        %v2074 = vpack.c.b16 %v1862, %v1858
        %v2075 = vpack.c.b16 %v1863, %v1859
        %v2076 = vpack.c.b16 %v1864, %v1860
        %v2077 = vpack.c.b16 %v1865, %v1861
        %v2078 = vpack.c.b16 %v1870, %v1866
        %v2079 = vpack.c.b16 %v1871, %v1867
        %v2080 = vpack.c.b16 %v1872, %v1868
        %v2081 = vpack.c.b16 %v1873, %v1869
        %v2082 = vpack.c.b16 %v1878, %v1874
        %v2083 = vpack.c.b16 %v1879, %v1875
        %v2084 = vpack.c.b16 %v1880, %v1876
        %v2085 = vpack.c.b16 %v1881, %v1877
        %v2086 = vpack.c.b16 %v1886, %v1882
        %v2087 = vpack.c.b16 %v1887, %v1883
        %v2088 = vpack.c.b16 %v1888, %v1884
        %v2089 = vpack.c.b16 %v1889, %v1885
        %v2090 = vpack.c.b16 %v1894, %v1890
        %v2091 = vpack.c.b16 %v1895, %v1891
        %v2092 = vpack.c.b16 %v1896, %v1892
        %v2093 = vpack.c.b16 %v1897, %v1893
        %v2094 = vpack.c.b16 %v1902, %v1898
        %v2095 = vpack.c.b16 %v1903, %v1899
        %v2096 = vpack.c.b16 %v1904, %v1900
        %v2097 = vpack.c.b16 %v1905, %v1901
        %v2098 = vpack.c.b16 %v1910, %v1906
        %v2099 = vpack.c.b16 %v1911, %v1907
        %v2100 = vpack.c.b16 %v1912, %v1908
        %v2101 = vpack.c.b16 %v1913, %v1909
        %v2102 = vpack.c.b16 %v1918, %v1914
        %v2103 = vpack.c.b16 %v1919, %v1915
        %v2104 = vpack.c.b16 %v1920, %v1916
        %v2105 = vpack.c.b16 %v1921, %v1917
        %v2106 = vpack.c.b16 %v1926, %v1922
        %v2107 = vpack.c.b16 %v1927, %v1923
        %v2108 = vpack.c.b16 %v1928, %v1924
        %v2109 = vpack.c.b16 %v1929, %v1925
        %v2110 = vpack.c.b16 %v1934, %v1930
        %v2111 = vpack.c.b16 %v1935, %v1931
        %v2112 = vpack.c.b16 %v1936, %v1932
        %v2113 = vpack.c.b16 %v1937, %v1933
        %v2114 = vpack.c.b16 %v1942, %v1938
        %v2115 = vpack.c.b16 %v1943, %v1939
        %v2116 = vpack.c.b16 %v1944, %v1940
        %v2117 = vpack.c.b16 %v1945, %v1941
        %v2118 = vpack.c.b16 %v1950, %v1946
        %v2119 = vpack.c.b16 %v1951, %v1947
        %v2120 = vpack.c.b16 %v1952, %v1948
        %v2121 = vpack.c.b16 %v1953, %v1949
        %v2122 = vpack.c.b16 %v1958, %v1954
        %v2123 = vpack.c.b16 %v1959, %v1955
        %v2124 = vpack.c.b16 %v1960, %v1956
        %v2125 = vpack.c.b16 %v1961, %v1957
        %v2126 = vpack.c.b16 %v1966, %v1962
        %v2127 = vpack.c.b16 %v1967, %v1963
        %v2128 = vpack.c.b16 %v1968, %v1964
        %v2129 = vpack.c.b16 %v1969, %v1965
        %v2130 = vpack.c.b16 %v1974, %v1970
        %v2131 = vpack.c.b16 %v1975, %v1971
        %v2132 = vpack.c.b16 %v1976, %v1972
        %v2133 = vpack.c.b16 %v1977, %v1973
        %v2134 = vpack.c.b16 %v1982, %v1978
        %v2135 = vpack.c.b16 %v1983, %v1979
        %v2136 = vpack.c.b16 %v1984, %v1980
        %v2137 = vpack.c.b16 %v1985, %v1981
        %v2138 = vpack.c.b16 %v1990, %v1986
        %v2139 = vpack.c.b16 %v1991, %v1987
        %v2140 = vpack.c.b16 %v1992, %v1988
        %v2141 = vpack.c.b16 %v1993, %v1989
        %v2142 = vpack.c.b16 %v1998, %v1994
        %v2143 = vpack.c.b16 %v1999, %v1995
        %v2144 = vpack.c.b16 %v2000, %v1996
        %v2145 = vpack.c.b16 %v2001, %v1997
        %v2146 = vpack.c.b16 %v2006, %v2002
        %v2147 = vpack.c.b16 %v2007, %v2003
        %v2148 = vpack.c.b16 %v2008, %v2004
        %v2149 = vpack.c.b16 %v2009, %v2005
        %v2150 = vpack.c.b16 %v2014, %v2010
        %v2151 = vpack.c.b16 %v2015, %v2011
        %v2152 = vpack.c.b16 %v2016, %v2012
        %v2153 = vpack.c.b16 %v2017, %v2013
        %v2154 = vpack.c.b16 %v2022, %v2018
        %v2155 = vpack.c.b16 %v2023, %v2019
        %v2156 = vpack.c.b16 %v2024, %v2020
        %v2157 = vpack.c.b16 %v2025, %v2021
        %v2158 = vpack.c.b16 %v2030, %v2026
        %v2159 = vpack.c.b16 %v2031, %v2027
        %v2160 = vpack.c.b16 %v2032, %v2028
        %v2161 = vpack.c.b16 %v2033, %v2029
        %2290 = vmatpush.bf16.msra.mxu0 %v2062
        %2291 = vmatpush.bf16.msra.mxu0 %v2058
        %2292 = vmatpush.bf16.msra.mxu0 %v2054
        %2293 = vmatpush.bf16.msra.mxu0 %v2050
        %2294 = vmatpush.bf16.msra.mxu0 %v2046
        %2295 = vmatpush.bf16.msra.mxu0 %v2042
        %2296 = vmatpush.bf16.msra.mxu0 %v2038
        %2297 = vmatpush.bf16.msra.mxu0 %v2034
        %2298 = vmatmul.bf16.gmra.mxu0 %v1642
        %v2299 = vpop.f32.mrf.mxu0
        %v2300 = vadd.f32 %v1458, %v2299
        %v2301 = vpop.f32.mrf.mxu0
        %v2302 = vadd.f32 %v1460, %v2301
        %2303 = vdwg.mxu0
        %2304 = vmatpush.bf16.msra.mxu0 %v2094
        %2305 = vmatpush.bf16.msra.mxu0 %v2090
        %2306 = vmatpush.bf16.msra.mxu0 %v2086
        %2307 = vmatpush.bf16.msra.mxu0 %v2082
        %2308 = vmatpush.bf16.msra.mxu0 %v2078
        %2309 = vmatpush.bf16.msra.mxu0 %v2074
        %2310 = vmatpush.bf16.msra.mxu0 %v2070
        %2311 = vmatpush.bf16.msra.mxu0 %v2066
        %2312 = vmatmul.bf16.gmra.mxu0 %v1643
        %v2313 = vpop.f32.mrf.mxu0
        %v2314 = vadd.f32 %v2300, %v2313
        %v2315 = vpop.f32.mrf.mxu0
        %v2316 = vadd.f32 %v2302, %v2315
        %2317 = vdwg.mxu0
        %2318 = vmatpush.bf16.msra.mxu0 %v2126
        %2319 = vmatpush.bf16.msra.mxu0 %v2122
        %2320 = vmatpush.bf16.msra.mxu0 %v2118
        %2321 = vmatpush.bf16.msra.mxu0 %v2114
        %2322 = vmatpush.bf16.msra.mxu0 %v2110
        %2323 = vmatpush.bf16.msra.mxu0 %v2106
        %2324 = vmatpush.bf16.msra.mxu0 %v2102
        %2325 = vmatpush.bf16.msra.mxu0 %v2098
        %2326 = vmatmul.bf16.gmra.mxu0 %v1644
        %v2327 = vpop.f32.mrf.mxu0
        %v2328 = vadd.f32 %v2314, %v2327
        %v2329 = vpop.f32.mrf.mxu0
        %v2330 = vadd.f32 %v2316, %v2329
        %2331 = vdwg.mxu0
        %2332 = vmatpush.bf16.msra.mxu0 %v2158
        %2333 = vmatpush.bf16.msra.mxu0 %v2154
        %2334 = vmatpush.bf16.msra.mxu0 %v2150
        %2335 = vmatpush.bf16.msra.mxu0 %v2146
        %2336 = vmatpush.bf16.msra.mxu0 %v2142
        %2337 = vmatpush.bf16.msra.mxu0 %v2138
        %2338 = vmatpush.bf16.msra.mxu0 %v2134
        %2339 = vmatpush.bf16.msra.mxu0 %v2130
        %2340 = vmatmul.bf16.gmra.mxu0 %v1645
        %v2341 = vpop.f32.mrf.mxu0
        %v2342 = vadd.f32 %v2328, %v2341
        %v2343 = vpop.f32.mrf.mxu0
        %v2344 = vadd.f32 %v2330, %v2343
        %2345 = vdwg.mxu0
        %2346 = vmatpush.bf16.msra.mxu0 %v2063
        %2347 = vmatpush.bf16.msra.mxu0 %v2059
        %2348 = vmatpush.bf16.msra.mxu0 %v2055
        %2349 = vmatpush.bf16.msra.mxu0 %v2051
        %2350 = vmatpush.bf16.msra.mxu0 %v2047
        %2351 = vmatpush.bf16.msra.mxu0 %v2043
        %2352 = vmatpush.bf16.msra.mxu0 %v2039
        %2353 = vmatpush.bf16.msra.mxu0 %v2035
        %2354 = vmatmul.bf16.gmra.mxu0 %v1642
        %v2355 = vpop.f32.mrf.mxu0
        %v2356 = vadd.f32 %v1514, %v2355
        %v2357 = vpop.f32.mrf.mxu0
        %v2358 = vadd.f32 %v1516, %v2357
        %2359 = vdwg.mxu0
        %2360 = vmatpush.bf16.msra.mxu0 %v2095
        %2361 = vmatpush.bf16.msra.mxu0 %v2091
        %2362 = vmatpush.bf16.msra.mxu0 %v2087
        %2363 = vmatpush.bf16.msra.mxu0 %v2083
        %2364 = vmatpush.bf16.msra.mxu0 %v2079
        %2365 = vmatpush.bf16.msra.mxu0 %v2075
        %2366 = vmatpush.bf16.msra.mxu0 %v2071
        %2367 = vmatpush.bf16.msra.mxu0 %v2067
        %2368 = vmatmul.bf16.gmra.mxu0 %v1643
        %v2369 = vpop.f32.mrf.mxu0
        %v2370 = vadd.f32 %v2356, %v2369
        %v2371 = vpop.f32.mrf.mxu0
        %v2372 = vadd.f32 %v2358, %v2371
        %2373 = vdwg.mxu0
        %2374 = vmatpush.bf16.msra.mxu0 %v2127
        %2375 = vmatpush.bf16.msra.mxu0 %v2123
        %2376 = vmatpush.bf16.msra.mxu0 %v2119
        %2377 = vmatpush.bf16.msra.mxu0 %v2115
        %2378 = vmatpush.bf16.msra.mxu0 %v2111
        %2379 = vmatpush.bf16.msra.mxu0 %v2107
        %2380 = vmatpush.bf16.msra.mxu0 %v2103
        %2381 = vmatpush.bf16.msra.mxu0 %v2099
        %2382 = vmatmul.bf16.gmra.mxu0 %v1644
        %v2383 = vpop.f32.mrf.mxu0
        %v2384 = vadd.f32 %v2370, %v2383
        %v2385 = vpop.f32.mrf.mxu0
        %v2386 = vadd.f32 %v2372, %v2385
        %2387 = vdwg.mxu0
        %2388 = vmatpush.bf16.msra.mxu0 %v2159
        %2389 = vmatpush.bf16.msra.mxu0 %v2155
        %2390 = vmatpush.bf16.msra.mxu0 %v2151
        %2391 = vmatpush.bf16.msra.mxu0 %v2147
        %2392 = vmatpush.bf16.msra.mxu0 %v2143
        %2393 = vmatpush.bf16.msra.mxu0 %v2139
        %2394 = vmatpush.bf16.msra.mxu0 %v2135
        %2395 = vmatpush.bf16.msra.mxu0 %v2131
        %2396 = vmatmul.bf16.gmra.mxu0 %v1645
        %v2397 = vpop.f32.mrf.mxu0
        %v2398 = vadd.f32 %v2384, %v2397
        %v2399 = vpop.f32.mrf.mxu0
        %v2400 = vadd.f32 %v2386, %v2399
        %2401 = vdwg.mxu0
        %2402 = vmatpush.bf16.msra.mxu0 %v2064
        %2403 = vmatpush.bf16.msra.mxu0 %v2060
        %2404 = vmatpush.bf16.msra.mxu0 %v2056
        %2405 = vmatpush.bf16.msra.mxu0 %v2052
        %2406 = vmatpush.bf16.msra.mxu0 %v2048
        %2407 = vmatpush.bf16.msra.mxu0 %v2044
        %2408 = vmatpush.bf16.msra.mxu0 %v2040
        %2409 = vmatpush.bf16.msra.mxu0 %v2036
        %2410 = vmatmul.bf16.gmra.mxu0 %v1642
        %v2411 = vpop.f32.mrf.mxu0
        %v2412 = vadd.f32 %v1570, %v2411
        %v2413 = vpop.f32.mrf.mxu0
        %v2414 = vadd.f32 %v1572, %v2413
        %2415 = vdwg.mxu0
        %2416 = vmatpush.bf16.msra.mxu0 %v2096
        %2417 = vmatpush.bf16.msra.mxu0 %v2092
        %2418 = vmatpush.bf16.msra.mxu0 %v2088
        %2419 = vmatpush.bf16.msra.mxu0 %v2084
        %2420 = vmatpush.bf16.msra.mxu0 %v2080
        %2421 = vmatpush.bf16.msra.mxu0 %v2076
        %2422 = vmatpush.bf16.msra.mxu0 %v2072
        %2423 = vmatpush.bf16.msra.mxu0 %v2068
        %2424 = vmatmul.bf16.gmra.mxu0 %v1643
        %v2425 = vpop.f32.mrf.mxu0
        %v2426 = vadd.f32 %v2412, %v2425
        %v2427 = vpop.f32.mrf.mxu0
        %v2428 = vadd.f32 %v2414, %v2427
        %2429 = vdwg.mxu0
        %2430 = vmatpush.bf16.msra.mxu0 %v2128
        %2431 = vmatpush.bf16.msra.mxu0 %v2124
        %2432 = vmatpush.bf16.msra.mxu0 %v2120
        %2433 = vmatpush.bf16.msra.mxu0 %v2116
        %2434 = vmatpush.bf16.msra.mxu0 %v2112
        %2435 = vmatpush.bf16.msra.mxu0 %v2108
        %2436 = vmatpush.bf16.msra.mxu0 %v2104
        %2437 = vmatpush.bf16.msra.mxu0 %v2100
        %2438 = vmatmul.bf16.gmra.mxu0 %v1644
        %v2439 = vpop.f32.mrf.mxu0
        %v2440 = vadd.f32 %v2426, %v2439
        %v2441 = vpop.f32.mrf.mxu0
        %v2442 = vadd.f32 %v2428, %v2441
        %2443 = vdwg.mxu0
        %2444 = vmatpush.bf16.msra.mxu0 %v2160
        %2445 = vmatpush.bf16.msra.mxu0 %v2156
        %2446 = vmatpush.bf16.msra.mxu0 %v2152
        %2447 = vmatpush.bf16.msra.mxu0 %v2148
        %2448 = vmatpush.bf16.msra.mxu0 %v2144
        %2449 = vmatpush.bf16.msra.mxu0 %v2140
        %2450 = vmatpush.bf16.msra.mxu0 %v2136
        %2451 = vmatpush.bf16.msra.mxu0 %v2132
        %2452 = vmatmul.bf16.gmra.mxu0 %v1645
        %v2453 = vpop.f32.mrf.mxu0
        %v2454 = vadd.f32 %v2440, %v2453
        %v2455 = vpop.f32.mrf.mxu0
        %v2456 = vadd.f32 %v2442, %v2455
        %2457 = vdwg.mxu0
        %2458 = vmatpush.bf16.msra.mxu0 %v2065
        %2459 = vmatpush.bf16.msra.mxu0 %v2061
        %2460 = vmatpush.bf16.msra.mxu0 %v2057
        %2461 = vmatpush.bf16.msra.mxu0 %v2053
        %2462 = vmatpush.bf16.msra.mxu0 %v2049
        %2463 = vmatpush.bf16.msra.mxu0 %v2045
        %2464 = vmatpush.bf16.msra.mxu0 %v2041
        %2465 = vmatpush.bf16.msra.mxu0 %v2037
        %2466 = vmatmul.bf16.gmra.mxu0 %v1642
        %v2467 = vpop.f32.mrf.mxu0
        %v2468 = vadd.f32 %v1626, %v2467
        %v2469 = vpop.f32.mrf.mxu0
        %v2470 = vadd.f32 %v1628, %v2469
        %2471 = vdwg.mxu0
        %2472 = vmatpush.bf16.msra.mxu0 %v2097
        %2473 = vmatpush.bf16.msra.mxu0 %v2093
        %2474 = vmatpush.bf16.msra.mxu0 %v2089
        %2475 = vmatpush.bf16.msra.mxu0 %v2085
        %2476 = vmatpush.bf16.msra.mxu0 %v2081
        %2477 = vmatpush.bf16.msra.mxu0 %v2077
        %2478 = vmatpush.bf16.msra.mxu0 %v2073
        %2479 = vmatpush.bf16.msra.mxu0 %v2069
        %2480 = vmatmul.bf16.gmra.mxu0 %v1643
        %v2481 = vpop.f32.mrf.mxu0
        %v2482 = vadd.f32 %v2468, %v2481
        %v2483 = vpop.f32.mrf.mxu0
        %v2484 = vadd.f32 %v2470, %v2483
        %2485 = vdwg.mxu0
        %2486 = vmatpush.bf16.msra.mxu0 %v2129
        %2487 = vmatpush.bf16.msra.mxu0 %v2125
        %2488 = vmatpush.bf16.msra.mxu0 %v2121
        %2489 = vmatpush.bf16.msra.mxu0 %v2117
        %2490 = vmatpush.bf16.msra.mxu0 %v2113
        %2491 = vmatpush.bf16.msra.mxu0 %v2109
        %2492 = vmatpush.bf16.msra.mxu0 %v2105
        %2493 = vmatpush.bf16.msra.mxu0 %v2101
        %2494 = vmatmul.bf16.gmra.mxu0 %v1644
        %v2495 = vpop.f32.mrf.mxu0
        %v2496 = vadd.f32 %v2482, %v2495
        %v2497 = vpop.f32.mrf.mxu0
        %v2498 = vadd.f32 %v2484, %v2497
        %2499 = vdwg.mxu0
        %2500 = vmatpush.bf16.msra.mxu0 %v2161
        %2501 = vmatpush.bf16.msra.mxu0 %v2157
        %2502 = vmatpush.bf16.msra.mxu0 %v2153
        %2503 = vmatpush.bf16.msra.mxu0 %v2149
        %2504 = vmatpush.bf16.msra.mxu0 %v2145
        %2505 = vmatpush.bf16.msra.mxu0 %v2141
        %2506 = vmatpush.bf16.msra.mxu0 %v2137
        %2507 = vmatpush.bf16.msra.mxu0 %v2133
        %2508 = vmatmul.bf16.gmra.mxu0 %v1645
        %v2509 = vpop.f32.mrf.mxu0
        %v2510 = vadd.f32 %v2496, %v2509
        %v2511 = vpop.f32.mrf.mxu0
        %v2512 = vadd.f32 %v2498, %v2511
        %2513 = vdwg.mxu0
        %v2514 = vld [vmem:[%s5] sm:$0xf]
        %v2516 = vperm.slane %v2514, 0
        %v2517 = vperm.slane %v2514, 1
        %v2518 = vperm.slane %v2514, 2
        %v2519 = vperm.slane %v2514, 3
        %v2524 = vadd.f32 %v2342, %v2516
        %v2525 = vadd.f32 %v2398, %v2517
        %v2526 = vadd.f32 %v2454, %v2518
        %v2527 = vadd.f32 %v2510, %v2519
        %v2528 = vadd.f32 %v2344, %v2516
        %v2529 = vadd.f32 %v2400, %v2517
        %v2530 = vadd.f32 %v2456, %v2518
        %v2531 = vadd.f32 %v2512, %v2519
        %v2532 = vmax.f32 %v2524, 0.0
        %v2533 = vmax.f32 %v2525, 0.0
        %v2534 = vmax.f32 %v2526, 0.0
        %v2535 = vmax.f32 %v2527, 0.0
        %v2536 = vmax.f32 %v2528, 0.0
        %v2537 = vmax.f32 %v2529, 0.0
        %v2538 = vmax.f32 %v2530, 0.0
        %v2539 = vmax.f32 %v2531, 0.0
        %v2540 = vpack.c.bf16 %v2536, %v2532
        %v2541 = vpack.c.bf16 %v2537, %v2533
        %v2542 = vpack.c.bf16 %v2538, %v2534
        %v2543 = vpack.c.bf16 %v2539, %v2535
        %v2544 = vld [vmem:[#allocation10] sm:$0xf]
        %v2545 = vld [vmem:[#allocation10 + $0x4] sm:$0xf]
        %v2546 = vld [vmem:[#allocation10 + $0x8] sm:$0xf]
        %v2547 = vld [vmem:[#allocation10 + $0xc] sm:$0xf]
        %v2548 = vld [vmem:[#allocation10 + $0x10] sm:$0xf]
        %v2549 = vld [vmem:[#allocation10 + $0x14] sm:$0xf]
        %v2550 = vld [vmem:[#allocation10 + $0x18] sm:$0xf]
        %v2551 = vld [vmem:[#allocation10 + $0x1c] sm:$0xf]
        %v2552 = vld [vmem:[#allocation10 + $0x20] sm:$0xf]
        %v2553 = vld [vmem:[#allocation10 + $0x24] sm:$0xf]
        %v2554 = vld [vmem:[#allocation10 + $0x28] sm:$0xf]
        %v2555 = vld [vmem:[#allocation10 + $0x2c] sm:$0xf]
        %v2556 = vld [vmem:[#allocation10 + $0x30] sm:$0xf]
        %v2557 = vld [vmem:[#allocation10 + $0x34] sm:$0xf]
        %v2558 = vld [vmem:[#allocation10 + $0x38] sm:$0xf]
        %v2559 = vld [vmem:[#allocation10 + $0x3c] sm:$0xf]
        %v2560 = vld [vmem:[#allocation10 + $0x40] sm:$0xf]
        %v2561 = vld [vmem:[#allocation10 + $0x44] sm:$0xf]
        %v2562 = vld [vmem:[#allocation10 + $0x48] sm:$0xf]
        %v2563 = vld [vmem:[#allocation10 + $0x4c] sm:$0xf]
        %v2564 = vld [vmem:[#allocation10 + $0x50] sm:$0xf]
        %v2565 = vld [vmem:[#allocation10 + $0x54] sm:$0xf]
        %v2566 = vld [vmem:[#allocation10 + $0x58] sm:$0xf]
        %v2567 = vld [vmem:[#allocation10 + $0x5c] sm:$0xf]
        %v2568 = vld [vmem:[#allocation10 + $0x60] sm:$0xf]
        %v2569 = vld [vmem:[#allocation10 + $0x64] sm:$0xf]
        %v2570 = vld [vmem:[#allocation10 + $0x68] sm:$0xf]
        %v2571 = vld [vmem:[#allocation10 + $0x6c] sm:$0xf]
        %v2572 = vld [vmem:[#allocation10 + $0x70] sm:$0xf]
        %v2573 = vld [vmem:[#allocation10 + $0x74] sm:$0xf]
        %v2574 = vld [vmem:[#allocation10 + $0x78] sm:$0xf]
        %v2575 = vld [vmem:[#allocation10 + $0x7c] sm:$0xf]
        %v2576 = vld [vmem:[#allocation10 + $0x80] sm:$0xf]
        %v2577 = vld [vmem:[#allocation10 + $0x84] sm:$0xf]
        %v2578 = vld [vmem:[#allocation10 + $0x88] sm:$0xf]
        %v2579 = vld [vmem:[#allocation10 + $0x8c] sm:$0xf]
        %v2580 = vld [vmem:[#allocation10 + $0x90] sm:$0xf]
        %v2581 = vld [vmem:[#allocation10 + $0x94] sm:$0xf]
        %v2582 = vld [vmem:[#allocation10 + $0x98] sm:$0xf]
        %v2583 = vld [vmem:[#allocation10 + $0x9c] sm:$0xf]
        %v2584 = vld [vmem:[#allocation10 + $0xa0] sm:$0xf]
        %v2585 = vld [vmem:[#allocation10 + $0xa4] sm:$0xf]
        %v2586 = vld [vmem:[#allocation10 + $0xa8] sm:$0xf]
        %v2587 = vld [vmem:[#allocation10 + $0xac] sm:$0xf]
        %v2588 = vld [vmem:[#allocation10 + $0xb0] sm:$0xf]
        %v2589 = vld [vmem:[#allocation10 + $0xb4] sm:$0xf]
        %v2590 = vld [vmem:[#allocation10 + $0xb8] sm:$0xf]
        %v2591 = vld [vmem:[#allocation10 + $0xbc] sm:$0xf]
        %v2592 = vld [vmem:[#allocation10 + $0xc0] sm:$0xf]
        %v2593 = vld [vmem:[#allocation10 + $0xc4] sm:$0xf]
        %v2594 = vld [vmem:[#allocation10 + $0xc8] sm:$0xf]
        %v2595 = vld [vmem:[#allocation10 + $0xcc] sm:$0xf]
        %v2596 = vld [vmem:[#allocation10 + $0xd0] sm:$0xf]
        %v2597 = vld [vmem:[#allocation10 + $0xd4] sm:$0xf]
        %v2598 = vld [vmem:[#allocation10 + $0xd8] sm:$0xf]
        %v2599 = vld [vmem:[#allocation10 + $0xdc] sm:$0xf]
        %v2600 = vld [vmem:[#allocation10 + $0xe0] sm:$0xf]
        %v2601 = vld [vmem:[#allocation10 + $0xe4] sm:$0xf]
        %v2602 = vld [vmem:[#allocation10 + $0xe8] sm:$0xf]
        %v2603 = vld [vmem:[#allocation10 + $0xec] sm:$0xf]
        %v2604 = vld [vmem:[#allocation10 + $0xf0] sm:$0xf]
        %v2605 = vld [vmem:[#allocation10 + $0xf4] sm:$0xf]
        %v2606 = vld [vmem:[#allocation10 + $0xf8] sm:$0xf]
        %v2607 = vld [vmem:[#allocation10 + $0xfc] sm:$0xf]
        %v2608 = vld [vmem:[%s7] sm:$0x1]
        %v2610 = vperm.slane %v2608, 0
        %v2676 = vunpack.c.l.b16 %v2544
        %v2677 = vunpack.c.l.b16 %v2545
        %v2678 = vunpack.c.l.b16 %v2546
        %v2679 = vunpack.c.l.b16 %v2547
        %v2680 = vunpack.c.l.b16 %v2548
        %v2681 = vunpack.c.l.b16 %v2549
        %v2682 = vunpack.c.l.b16 %v2550
        %v2683 = vunpack.c.l.b16 %v2551
        %v2684 = vunpack.c.l.b16 %v2552
        %v2685 = vunpack.c.l.b16 %v2553
        %v2686 = vunpack.c.l.b16 %v2554
        %v2687 = vunpack.c.l.b16 %v2555
        %v2688 = vunpack.c.l.b16 %v2556
        %v2689 = vunpack.c.l.b16 %v2557
        %v2690 = vunpack.c.l.b16 %v2558
        %v2691 = vunpack.c.l.b16 %v2559
        %v2692 = vunpack.c.l.b16 %v2560
        %v2693 = vunpack.c.l.b16 %v2561
        %v2694 = vunpack.c.l.b16 %v2562
        %v2695 = vunpack.c.l.b16 %v2563
        %v2696 = vunpack.c.l.b16 %v2564
        %v2697 = vunpack.c.l.b16 %v2565
        %v2698 = vunpack.c.l.b16 %v2566
        %v2699 = vunpack.c.l.b16 %v2567
        %v2700 = vunpack.c.l.b16 %v2568
        %v2701 = vunpack.c.l.b16 %v2569
        %v2702 = vunpack.c.l.b16 %v2570
        %v2703 = vunpack.c.l.b16 %v2571
        %v2704 = vunpack.c.l.b16 %v2572
        %v2705 = vunpack.c.l.b16 %v2573
        %v2706 = vunpack.c.l.b16 %v2574
        %v2707 = vunpack.c.l.b16 %v2575
        %v2708 = vunpack.c.l.b16 %v2576
        %v2709 = vunpack.c.l.b16 %v2577
        %v2710 = vunpack.c.l.b16 %v2578
        %v2711 = vunpack.c.l.b16 %v2579
        %v2712 = vunpack.c.l.b16 %v2580
        %v2713 = vunpack.c.l.b16 %v2581
        %v2714 = vunpack.c.l.b16 %v2582
        %v2715 = vunpack.c.l.b16 %v2583
        %v2716 = vunpack.c.l.b16 %v2584
        %v2717 = vunpack.c.l.b16 %v2585
        %v2718 = vunpack.c.l.b16 %v2586
        %v2719 = vunpack.c.l.b16 %v2587
        %v2720 = vunpack.c.l.b16 %v2588
        %v2721 = vunpack.c.l.b16 %v2589
        %v2722 = vunpack.c.l.b16 %v2590
        %v2723 = vunpack.c.l.b16 %v2591
        %v2724 = vunpack.c.l.b16 %v2592
        %v2725 = vunpack.c.l.b16 %v2593
        %v2726 = vunpack.c.l.b16 %v2594
        %v2727 = vunpack.c.l.b16 %v2595
        %v2728 = vunpack.c.l.b16 %v2596
        %v2729 = vunpack.c.l.b16 %v2597
        %v2730 = vunpack.c.l.b16 %v2598
        %v2731 = vunpack.c.l.b16 %v2599
        %v2732 = vunpack.c.l.b16 %v2600
        %v2733 = vunpack.c.l.b16 %v2601
        %v2734 = vunpack.c.l.b16 %v2602
        %v2735 = vunpack.c.l.b16 %v2603
        %v2736 = vunpack.c.l.b16 %v2604
        %v2737 = vunpack.c.l.b16 %v2605
        %v2738 = vunpack.c.l.b16 %v2606
        %v2739 = vunpack.c.l.b16 %v2607
        %v2740 = vpack.c.b16 %v2677, %v2676
        %v2741 = vpack.c.b16 %v2679, %v2678
        %v2742 = vpack.c.b16 %v2681, %v2680
        %v2743 = vpack.c.b16 %v2683, %v2682
        %v2744 = vpack.c.b16 %v2685, %v2684
        %v2745 = vpack.c.b16 %v2687, %v2686
        %v2746 = vpack.c.b16 %v2689, %v2688
        %v2747 = vpack.c.b16 %v2691, %v2690
        %v2748 = vpack.c.b16 %v2693, %v2692
        %v2749 = vpack.c.b16 %v2695, %v2694
        %v2750 = vpack.c.b16 %v2697, %v2696
        %v2751 = vpack.c.b16 %v2699, %v2698
        %v2752 = vpack.c.b16 %v2701, %v2700
        %v2753 = vpack.c.b16 %v2703, %v2702
        %v2754 = vpack.c.b16 %v2705, %v2704
        %v2755 = vpack.c.b16 %v2707, %v2706
        %v2756 = vpack.c.b16 %v2709, %v2708
        %v2757 = vpack.c.b16 %v2711, %v2710
        %v2758 = vpack.c.b16 %v2713, %v2712
        %v2759 = vpack.c.b16 %v2715, %v2714
        %v2760 = vpack.c.b16 %v2717, %v2716
        %v2761 = vpack.c.b16 %v2719, %v2718
        %v2762 = vpack.c.b16 %v2721, %v2720
        %v2763 = vpack.c.b16 %v2723, %v2722
        %v2764 = vpack.c.b16 %v2725, %v2724
        %v2765 = vpack.c.b16 %v2727, %v2726
        %v2766 = vpack.c.b16 %v2729, %v2728
        %v2767 = vpack.c.b16 %v2731, %v2730
        %v2768 = vpack.c.b16 %v2733, %v2732
        %v2769 = vpack.c.b16 %v2735, %v2734
        %v2770 = vpack.c.b16 %v2737, %v2736
        %v2771 = vpack.c.b16 %v2739, %v2738
        %2804 = vmatpush.bf16.msra.mxu0 %v2747
        %2805 = vmatpush.bf16.msra.mxu0 %v2746
        %2806 = vmatpush.bf16.msra.mxu0 %v2745
        %2807 = vmatpush.bf16.msra.mxu0 %v2744
        %2808 = vmatpush.bf16.msra.mxu0 %v2743
        %2809 = vmatpush.bf16.msra.mxu0 %v2742
        %2810 = vmatpush.bf16.msra.mxu0 %v2741
        %2811 = vmatpush.bf16.msra.mxu0 %v2740
        %2812 = vmatmul.bf16.gmra.mxu0 %v2540
        %v2813 = vpop.f32.mrf.mxu0
        %v2814 = vadd.f32 %v2610, %v2813
        %v2815 = vpop.f32.mrf.mxu0
        %v2816 = vadd.f32 %v2610, %v2815
        %2817 = vdwg.mxu0
        %2818 = vmatpush.bf16.msra.mxu0 %v2755
        %2819 = vmatpush.bf16.msra.mxu0 %v2754
        %2820 = vmatpush.bf16.msra.mxu0 %v2753
        %2821 = vmatpush.bf16.msra.mxu0 %v2752
        %2822 = vmatpush.bf16.msra.mxu0 %v2751
        %2823 = vmatpush.bf16.msra.mxu0 %v2750
        %2824 = vmatpush.bf16.msra.mxu0 %v2749
        %2825 = vmatpush.bf16.msra.mxu0 %v2748
        %2826 = vmatmul.bf16.gmra.mxu0 %v2541
        %v2827 = vpop.f32.mrf.mxu0
        %v2828 = vadd.f32 %v2814, %v2827
        %v2829 = vpop.f32.mrf.mxu0
        %v2830 = vadd.f32 %v2816, %v2829
        %2831 = vdwg.mxu0
        %2832 = vmatpush.bf16.msra.mxu0 %v2763
        %2833 = vmatpush.bf16.msra.mxu0 %v2762
        %2834 = vmatpush.bf16.msra.mxu0 %v2761
        %2835 = vmatpush.bf16.msra.mxu0 %v2760
        %2836 = vmatpush.bf16.msra.mxu0 %v2759
        %2837 = vmatpush.bf16.msra.mxu0 %v2758
        %2838 = vmatpush.bf16.msra.mxu0 %v2757
        %2839 = vmatpush.bf16.msra.mxu0 %v2756
        %2840 = vmatmul.bf16.gmra.mxu0 %v2542
        %v2841 = vpop.f32.mrf.mxu0
        %v2842 = vadd.f32 %v2828, %v2841
        %v2843 = vpop.f32.mrf.mxu0
        %v2844 = vadd.f32 %v2830, %v2843
        %2845 = vdwg.mxu0
        %2846 = vmatpush.bf16.msra.mxu0 %v2771
        %2847 = vmatpush.bf16.msra.mxu0 %v2770
        %2848 = vmatpush.bf16.msra.mxu0 %v2769
        %2849 = vmatpush.bf16.msra.mxu0 %v2768
        %2850 = vmatpush.bf16.msra.mxu0 %v2767
        %2851 = vmatpush.bf16.msra.mxu0 %v2766
        %2852 = vmatpush.bf16.msra.mxu0 %v2765
        %2853 = vmatpush.bf16.msra.mxu0 %v2764
        %2854 = vmatmul.bf16.gmra.mxu0 %v2543
        %v2855 = vpop.f32.mrf.mxu0
        %v2856 = vadd.f32 %v2842, %v2855
        %v2857 = vpop.f32.mrf.mxu0
        %v2858 = vadd.f32 %v2844, %v2857
        %2859 = vdwg.mxu0
        %v2860 = vmul.f32 %v2856, 0.5
        %v2861 = vmul.f32 %v2858, 0.5
        %v2862 = vtanh.pop %v2860
        %v2863 = vtanh.pop %v2861
        %v2864 = vadd.f32 %v2862, 1.0
        %v2865 = vadd.f32 %v2863, 1.0
        %v2866 = vmul.f32 %v2864, 0.5
        %v2867 = vmul.f32 %v2865, 0.5
        %v2868 = vpack.c.bf16 %v2866, %v2866
        %v2869 = vpack.c.bf16 %v2867, %v2867
        %2870 = vst [vmem:[%s462] sm:$0xf] %v2868
        %2871 = vst [vmem:[%s462 + $0x4] sm:$0xf] %v2869
        %v2872 = vunpack.c.l.bf16 %v2868
        %v2873 = vunpack.c.l.bf16 %v2869
        %v2874 = vmax.f32 %v2872, 1e-05
        %v2875 = vmax.f32 %v2873, 1e-05
        %v2876 = vmin.f32 %v2874, 0.99999
        %v2877 = vmin.f32 %v2875, 0.99999
        %v2878 = vld [vmem:[%s475] sm:$0xf]
        %v2879 = vld [vmem:[%s475 + $0x4] sm:$0xf]
        %v2880 = vunpack.c.l.bf16 %v2878
        %v2881 = vunpack.c.l.bf16 %v2879
        %v2882 = vlaneseq
        %v2883 = vshrl.u32 %v2882, 7
        %v2884 = vadd.s32 %v2883, 8
        %s2885 = smul.u32 %s31, 16
        %v2886 = vstv %s2885
        %v2887 = vadd.s32 %v2883, %v2886
        %v2888 = vadd.s32 %v2884, %v2886
        %vm2889 = vcmp.lt.s32.totalorder %v2887, 16
        %vm2890 = vcmp.lt.s32.totalorder %v2888, 16
        %v2891 = vlog2.pop %v2876
        %v2892 = vmul.f32 %v2891, 0.6931472
        %v2893 = vlog2.pop %v2877
        %v2894 = vmul.f32 %v2893, 0.6931472
        %v2895 = vsub.f32 0.0, %v2892
        %v2896 = vsub.f32 0.0, %v2894
        %v2897 = vmul.f32 %v2880, %v2895
        %v2898 = vmul.f32 %v2881, %v2896
        %v2899 = vsub.f32 1.0, %v2880
        %v2900 = vsub.f32 1.0, %v2881
        %v2901 = vsub.f32 1.0, %v2876
        %v2902 = vsub.f32 1.0, %v2877
        %v2903 = vlog2.pop %v2901
        %v2904 = vmul.f32 %v2903, 0.6931472
        %v2905 = vlog2.pop %v2902
        %v2906 = vmul.f32 %v2905, 0.6931472
        %v2907 = vsub.f32 0.0, %v2904
        %v2908 = vsub.f32 0.0, %v2906
        %v2909 = vmul.f32 %v2899, %v2907
        %v2910 = vmul.f32 %v2900, %v2908
        %v2911 = vmul.f32 %v2901, %v2897
        %v2912 = vmul.f32 %v2902, %v2898
        %v2913 = vsel %vm2889, %v2911, 0.0
        %v2914 = vsel %vm2890, %v2912, 0.0
        %v2915 = vmul.f32 %v2876, %v2876
        %v2916 = vmul.f32 %v2877, %v2877
        %v2917 = vmul.f32 %v2915, %v2909
        %v2918 = vmul.f32 %v2916, %v2910
        %v2919 = vsel %vm2889, %v2917, 0.0
        %v2920 = vsel %vm2890, %v2918, 0.0
        %v2921 = vsel %vm2889, %v2880, 0.0
        %v2922 = vsel %vm2890, %v2881, 0.0
        %vm2923 = vcmask 130048
        %v2924 = vsel %vm2923, %v2913, 0.0
        %v2925 = vsel %vm2923, %v2914, 0.0
        %v2926 = vadd.f32 %v2924, %v2925
        %2927 = vadd.xlane.f32.xlu0 %v2926
        %v2928 = vpop.xlane.xlu0 %2927
        %v2929 = vrot.slane %v2928, 4
        %v2930 = vadd.f32 %v2928, %v2929
        %v2931 = vrot.slane %v2930, 2
        %v2932 = vadd.f32 %v2930, %v2931
        %v2933 = vrot.slane %v2932, 1
        %v2934 = vadd.f32 %v2932, %v2933
        %s2935 = vtos %v2934
        %v2936 = vsel %vm2923, %v2919, 0.0
        %v2937 = vsel %vm2923, %v2920, 0.0
        %v2938 = vadd.f32 %v2936, %v2937
        %2939 = vadd.xlane.f32.xlu0 %v2938
        %v2940 = vpop.xlane.xlu0 %2939
        %v2941 = vrot.slane %v2940, 4
        %v2942 = vadd.f32 %v2940, %v2941
        %v2943 = vrot.slane %v2942, 2
        %v2944 = vadd.f32 %v2942, %v2943
        %v2945 = vrot.slane %v2944, 1
        %v2946 = vadd.f32 %v2944, %v2945
        %s2947 = vtos %v2946
        %v2948 = vsel %vm2923, %v2921, 0.0
        %v2949 = vsel %vm2923, %v2922, 0.0
        %v2950 = vadd.f32 %v2948, %v2949
        %2951 = vadd.xlane.f32.xlu0 %v2950
        %v2952 = vpop.xlane.xlu0 %2951
        %v2953 = vrot.slane %v2952, 4
        %v2954 = vadd.f32 %v2952, %v2953
        %v2955 = vrot.slane %v2954, 2
        %v2956 = vadd.f32 %v2954, %v2955
        %v2957 = vrot.slane %v2956, 1
        %v2958 = vadd.f32 %v2956, %v2957
        %s2959 = vtos %v2958
        %vm2960 = vcmp.eq.s32.totalorder %v2883, 0
        %vm2961 = vcmp.eq.s32.totalorder %v2883, 1
        %vm2962 = vcmp.eq.s32.totalorder %v2883, 2
        %v2963 = vstv %s2959
        %v2964 = vsel %vm2962, %v2963, 0.0
        %v2965 = vstv %s2947
        %v2966 = vsel %vm2961, %v2965, %v2964
        %v2967 = vstv %s2935
        %v2968 = vsel %vm2960, %v2967, %v2966
        %2969 = vst [vmem:[%s481] sm:$0xff] %v2968
        %s2970 = sand.u32 %s222, 1
        %s2971 = scalar_lea.sflag [#allocation4], %s2970
        %s2972 = sand.u32 %s222, 1
        %s2973 = smul.addr %s2972, 8
        %s2974 = scalar_lea.vmem [#allocation11], %s2973
        %p2975 = scmp.lt.s32.totalorder %s31, 1
        %s2976 = scalar_select %p2975, %s31, 1
        %s2977 = smul.addr %s2976, 8
        %s2978 = scalar_lea.vmem %s9, %s2977
        // Predicated region
        $region73: #{_run_train.1} parent=51 // pred_check
          %p2979 = pneg %p232
        $region74: #{_run_train.1} parent=51 // pred_check_branch
          %2981 = sbr.rel (%p2979) target = $region76
        $region75: #{_run_train.1} parent=51 // pred_region
          %s2982 = smul.u32 2, %s31
          %2984 = vsyncadd %s2971, 0
          %s2985 = smul.addr %s2982, 4
          %s2986 = scalar_lea.hbm %s8, %s2985
          %s2987 = sshll.u32 %s2974, 4
          %s2988 = int_to_ptr.vmem [resolvable:$true] %s2987
          %s2989 = sshll.u32 %s2986, 4
          %s2990 = int_to_ptr.hbm [resolvable:$true] %s2989
          %2995 = dma.vmem_to_hbm [thread:$0]  %s2988, 128, %s2990, %s2971, 64, 64, 4
        $region76: #{_run_train.1} parent=51 // pred_fallthru
          _
        // Predicated region
        $region77: #{_run_train.1} parent=51 // pred_check
          %p2996 = pneg %p258
        $region78: #{_run_train.1} parent=51 // pred_check_branch
          %2998 = sbr.rel (%p2996) target = $region80
        $region79: #{_run_train.1} parent=51 // pred_region
          _
        $region80: #{_run_train.1} parent=51 // pred_fallthru
          _
      $region52: #{_run_train.1} parent=5 // pred_fallthru
        _
      %p2999 = scmp.le.s32.totalorder 2, %s26
      // Predicated region
      $region81: #{_run_train.1} parent=5 // pred_check
        %p3000 = pneg %p2999
      $region82: #{_run_train.1} parent=5 // pred_check_branch
        %3002 = sbr.rel (%p3000) target = $region84
      $region83: #{_run_train.1} parent=5 // pred_region
        %s3003 = ssub.s32 %s26, 2
        // Predicated region
        $region85: #{_run_train.1} parent=83 // pred_check
          %p3004 = pneg %p238
        $region86: #{_run_train.1} parent=83 // pred_check_branch
          %3006 = sbr.rel (%p3004) target = $region88
        $region87: #{_run_train.1} parent=83 // pred_region
          %s3007 = sand.u32 %s223, 1
          %s3008 = scalar_lea.sflag [#allocation4], %s3007
          %s3009 = sand.u32 %s223, 1
          %s3010 = smul.addr %s3009, 8
          %s3011 = scalar_lea.vmem [#allocation11], %s3010
          %3013 = dma.done %s3008, 128
        $region88: #{_run_train.1} parent=83 // pred_fallthru
          _
        // Predicated region
        $region89: #{_run_train.1} parent=83 // pred_check
          %p3014 = pneg %p264
        $region90: #{_run_train.1} parent=83 // pred_check_branch
          %3016 = sbr.rel (%p3014) target = $region92
        $region91: #{_run_train.1} parent=83 // pred_region
          %p3017 = scmp.lt.s32.totalorder %s32, 1
          %s3018 = scalar_select %p3017, %s32, 1
          %s3019 = smul.addr %s3018, 8
          %s3020 = scalar_lea.vmem %s9, %s3019
        $region92: #{_run_train.1} parent=83 // pred_fallthru
          _
      $region84: #{_run_train.1} parent=5 // pred_fallthru
        _
    $region6: #{_run_train.1} parent=1 // loop_footer
      %s30 = sadd.s32 1, %s26
    $region7: #{_run_train.1} parent=1 // loop_footer_branch
      %25 = sbr.rel target = $region3
    $region8: #{_run_train.1} parent=1 // loop_exit
      _
    %3021 = vsyncpa [#allocation3], 1
    %s3022 = scalar_lea.sflag [#allocation3], 1
    %3023 = vsyncpa %s3022, 1
    %3024 = vsyncpa [#allocation6], 1
    %s3025 = scalar_lea.sflag [#allocation6], 1
    %3026 = vsyncpa %s3025, 1
    %3027 = vsyncpa [#allocation9], 1
    %3028 = vsyncpa [#allocation4], 1
    %s3029 = scalar_lea.sflag [#allocation4], 1
    %3030 = vsyncpa %s3029, 1

</llo_original>
